<compile_context>
chip_gen: v7x
topology: tpu7x:2x2x1
jax: 0.10.0
libtpu: 0.0.40
codegen_flags: <defaults>
</compile_context>

<pallas_src>
import numpy as np
import jax
import jax.numpy as jnp
from jax.experimental import pallas as pl
from jax.experimental.pallas import tpu as pltpu

# --- configuration -----------------------------------------------------------
# The PyTorch forward hardcodes u.view(B, 32*6*6, -1): out_channels=32,
# kernel=9, stride=2 and a 20x20 input (-> 6x6 conv output) are required.
# in_channels is the only free knob (module default 256); keep it small here.
B      = 2
IN_C   = 16
OC     = 32
K      = 9
STRIDE = 2
CAPS   = 8
H_IN   = 20
W_IN   = 20
OH = (H_IN - K) // STRIDE + 1          # 6
OW = (W_IN - K) // STRIDE + 1          # 6
NS    = OH * OW                        # 36 spatial positions
COLS  = CAPS * OC                      # 256 (cap, oc) channels -> lane axis
HALF  = COLS // 2                      # 128 even-oc / 128 odd-oc columns
GROUP = CAPS                           # squash group size (= view's last dim)
PATCH = IN_C * K * K                   # 1296 patch features, ordered (ic, kh, kw)
PATCH_PAD = ((PATCH + 1 + 127) // 128) * 128    # +1 bias column, pad -> 1408

BT = 2                                 # batches per grid step (toy: all of them)
MT = BT * NS                           # 72 rows per grid step
assert B % BT == 0 and MT % 8 == 0
assert (2 * NS) % GROUP == 0 and (OC * NS) % GROUP == 0


# --- Pallas kernel (conv-as-matmul + bias + squash, fully fused) --------------
def primary_caps_kernel(p_ref, w_ref, g_ref, o_ref):
    # p_ref: (MT, PATCH_PAD)  bf16  rows=(batch-in-tile, spatial); 1s bias col, zero K-pad
    # w_ref: (PATCH_PAD, 256) bf16  cols=[even-oc | odd-oc] x (cap, oc//2); bias row folded
    # g_ref: (4, MT, MT)      bf16  block-diagonal group masks Mee, Meo, Moe, Moo
    # o_ref: (MT, 256)        f32

    # conv (+bias) as one lane-dense MXU matmul, all 256 output channels on lanes
    y = jnp.dot(p_ref[...], w_ref[...], preferred_element_type=jnp.float32)   # (MT, 256)
    ye = y[:, :HALF]       # even-oc columns (lane-tile aligned slice, free)
    yo = y[:, HALF:]       # odd-oc columns

    # Per-group sum of squares, broadcast back to every member of its group.
    # Groups of 8 consecutive flat (oc, spatial) elements live inside one
    # (cap, oc-pair) chunk of 72 spatial values, so the group sums are LEFT
    # matmuls with constant 0/1 masks over the spatial (row) axis — all MXU,
    # no cross-lane relayouts.  bf16 operands, f32 accumulation.
    y2e = (ye * ye).astype(jnp.bfloat16)
    y2o = (yo * yo).astype(jnp.bfloat16)
    s_e = (jnp.dot(g_ref[0], y2e, preferred_element_type=jnp.float32)
           + jnp.dot(g_ref[1], y2o, preferred_element_type=jnp.float32))
    s_o = (jnp.dot(g_ref[2], y2e, preferred_element_type=jnp.float32)
           + jnp.dot(g_ref[3], y2o, preferred_element_type=jnp.float32))

    # squash factor s/((1+s)*sqrt(s)) == sqrt(s)/(1+s); sqrt + approx recip -> EUP;
    # elementwise math stays f32.
    f_e = jnp.sqrt(s_e) * pl.reciprocal(1.0 + s_e, approx=True)
    f_o = jnp.sqrt(s_o) * pl.reciprocal(1.0 + s_o, approx=True)

    o_ref[:, :HALF] = ye * f_e       # full 128-lane-tile (unmasked) stores
    o_ref[:, HALF:] = yo * f_o


# --- host-side parameter / constant prep (done once, outside the jit path) ---
def group_masks(bt):
    # Within a (cap, oc-pair) chunk of length 72, chunk index t = parity*36 + s;
    # same squash group  <=>  t // 8 equal.  Block-diagonal over batches in the tile.
    s = np.arange(NS)
    te = s              # chunk index of an even-oc element at spatial s
    to = NS + s         # chunk index of an odd-oc element at spatial s

    def mask(ta, tb):
        return (ta[:, None] // GROUP == tb[None, :] // GROUP).astype(np.float32)

    per_batch = [mask(te, te), mask(te, to), mask(to, te), mask(to, to)]
    eye = np.eye(bt, dtype=np.float32)
    big = np.stack([np.kron(eye, m) for m in per_batch])      # (4, bt*NS, bt*NS)
    return jnp.asarray(big, dtype=jnp.bfloat16)


def prepare_params(w_caps, b_caps):
    # w_caps: (CAPS, OC, IN_C, K, K) -> flat row = cap*OC + oc,
    # col = ic*K*K + kh*K + kw (matches conv_general_dilated_patches feature order).
    wm = w_caps.reshape(CAPS * OC, PATCH)
    bf = b_caps.reshape(CAPS * OC)
    # Output-column order: [all even-oc | all odd-oc], each ordered (cap, oc//2).
    w_cat = jnp.concatenate([wm[0::2], wm[1::2]], axis=0)              # (256, PATCH)
    b_cat = jnp.concatenate([bf[0::2], bf[1::2]])                      # (256,)
    w_aug = jnp.concatenate([w_cat, b_cat[:, None]], axis=1)           # bias folded
    w_aug = jnp.pad(w_aug, ((0, 0), (0, PATCH_PAD - PATCH - 1)))       # zero K-pad
    return jnp.transpose(w_aug).astype(jnp.bfloat16)                   # (PATCH_PAD, 256)


# --- forward pass ------------------------------------------------------------
@jax.jit
def primary_caps_forward(x, w_t, gmat):
    bn = x.shape[0]
    assert bn % BT == 0
    # im2col via one fused XLA patches op (bf16 halves traffic).
    # Output: (B, IN_C*K*K, OH, OW), feature dim ordered (ic, kh, kw).
    patches = jax.lax.conv_general_dilated_patches(
        x.astype(jnp.bfloat16), (K, K), (STRIDE, STRIDE), "VALID")
    pt = patches.reshape(bn, PATCH, NS).transpose(0, 2, 1)             # (B, NS, PATCH)
    pt = jnp.concatenate(
        [pt,
         jnp.ones((bn, NS, 1), pt.dtype),                              # bias column
         jnp.zeros((bn, NS, PATCH_PAD - PATCH - 1), pt.dtype)],        # K-pad to 1408
        axis=-1)
    pt = pt.reshape(bn * NS, PATCH_PAD)                                # rows = (batch, spatial)

    out = pl.pallas_call(
        primary_caps_kernel,
        out_shape=jax.ShapeDtypeStruct((bn * NS, COLS), jnp.float32),
        grid=(bn // BT,),
        in_specs=[
            pl.BlockSpec((MT, PATCH_PAD), lambda i: (i, 0)),
            pl.BlockSpec((PATCH_PAD, COLS), lambda i: (0, 0)),
            pl.BlockSpec((4, MT, MT), lambda i: (0, 0, 0)),
        ],
        out_specs=pl.BlockSpec((MT, COLS), lambda i: (i, 0)),
        compiler_params=pltpu.CompilerParams(
            dimension_semantics=("parallel",)),
    )(pt, w_t, gmat)

    # (B*NS, 256) lane-dense kernel layout -> torch's .view(B, 1152, 8) layout.
    u = out.reshape(bn, NS, 2, CAPS, OC // 2)       # (b, s, parity, cap, oc//2)
    u = jnp.transpose(u, (0, 3, 4, 2, 1))           # (b, cap, oc//2, parity, s)
    return u.reshape(bn, OC * OH * OW, CAPS)


# --- pure-JAX reference (independent path, for validation only) --------------
def ref_forward(x, w_caps, b_caps):
    outs = []
    for c in range(CAPS):
        o = jax.lax.conv_general_dilated(
            x, w_caps[c], (STRIDE, STRIDE), "VALID",
            dimension_numbers=("NCHW", "OIHW", "NCHW"))
        o = o + b_caps[c][None, :, None, None]
        outs.append(o)
    u = jnp.stack(outs, axis=1)                     # (B, CAPS, OC, OH, OW)
    u = u.reshape(x.shape[0], OC * OH * OW, -1)     # (B, 1152, 8) == torch .view
    s = jnp.sum(u * u, axis=-1, keepdims=True)
    return s * u / ((1.0 + s) * jnp.sqrt(s))


# --- main --------------------------------------------------------------------
if __name__ == "__main__":
    key = jax.random.PRNGKey(0)
    kx, kw, kb = jax.random.split(key, 3)

    x = jax.random.normal(kx, (B, IN_C, H_IN, W_IN), dtype=jnp.float32)

    # deterministic Conv2d-style init (uniform +/- 1/sqrt(fan_in))
    fan_in = IN_C * K * K
    bound = 1.0 / np.sqrt(fan_in)
    w_caps = jax.random.uniform(kw, (CAPS, OC, IN_C, K, K),
                                minval=-bound, maxval=bound, dtype=jnp.float32)
    b_caps = jax.random.uniform(kb, (CAPS, OC),
                                minval=-bound, maxval=bound, dtype=jnp.float32)

    # weight / bias / mask prep hoisted out of the per-call path
    w_t = prepare_params(w_caps, b_caps)
    gmat = group_masks(BT)

    out = primary_caps_forward(x, w_t, gmat)
    out = jax.block_until_ready(out)

    assert out.shape == (B, OC * OH * OW, CAPS), out.shape
    assert bool(jnp.all(jnp.isfinite(out)))

    ref = ref_forward(x, w_caps, b_caps)
    np.testing.assert_allclose(np.asarray(out), np.asarray(ref),
                               rtol=5e-2, atol=5e-2)

    print("KERNEL_OK")
</pallas_src>

<mosaic_0001>
module attributes {stable_mosaic.version = 11 : i64} {
  func.func @primary_caps_kernel(%arg0: i32, %arg1: memref<72x1408xbf16, #tpu.memory_space<vmem>>, %arg2: memref<1408x256xbf16, #tpu.memory_space<vmem>>, %arg3: memref<4x72x72xbf16, #tpu.memory_space<vmem>>, %arg4: memref<72x256xf32, #tpu.memory_space<vmem>>) attributes {dimension_semantics = [#tpu.dimension_semantics<parallel>], iteration_bounds = array<i64: 1>, scalar_prefetch = 0 : i64, scratch_operands = 0 : i64, tpu.core_type = #tpu.core_type<tc>, window_params = [{transform_indices = @transform_0, window_bounds = array<i64: 72, 1408>}, {pipeline_mode = #tpu.pipeline_mode<synchronous>, transform_indices = @transform_1, window_bounds = array<i64: 1408, 256>}, {pipeline_mode = #tpu.pipeline_mode<synchronous>, transform_indices = @transform_2, window_bounds = array<i64: 4, 72, 72>}, {transform_indices = @transform_3, window_bounds = array<i64: 72, 256>}]} {
    %c0 = arith.constant 0 : index
    %c0_0 = arith.constant 0 : index
    %0 = vector.load %arg1[%c0, %c0_0] : memref<72x1408xbf16, #tpu.memory_space<vmem>>, vector<72x1408xbf16>
    %c0_1 = arith.constant 0 : index
    %c0_2 = arith.constant 0 : index
    %1 = vector.load %arg2[%c0_1, %c0_2] : memref<1408x256xbf16, #tpu.memory_space<vmem>>, vector<1408x256xbf16>
    %cst = arith.constant dense<0.000000e+00> : vector<72x256xf32>
    %2 = tpu.matmul %0, %1, %cst {dimension_numbers = #tpu.dot_dimension_numbers<[1], [0], [0], [1], [0, 0, 1, 1], [], []>} : vector<72x1408xbf16>, vector<1408x256xbf16>, vector<72x256xf32> -> vector<72x256xf32>
    %3 = vector.extract_strided_slice %2 {offsets = [0, 0], sizes = [72, 128], strides = [1, 1]} : vector<72x256xf32> to vector<72x128xf32>
    %4 = vector.extract_strided_slice %2 {offsets = [0, 128], sizes = [72, 128], strides = [1, 1]} : vector<72x256xf32> to vector<72x128xf32>
    %5 = arith.mulf %3, %3 : vector<72x128xf32>
    %6 = arith.truncf %5 : vector<72x128xf32> to vector<72x128xbf16>
    %7 = arith.mulf %4, %4 : vector<72x128xf32>
    %8 = arith.truncf %7 : vector<72x128xf32> to vector<72x128xbf16>
    %c0_3 = arith.constant 0 : index
    %c0_4 = arith.constant 0 : index
    %c0_5 = arith.constant 0 : index
    %9 = vector.load %arg3[%c0_3, %c0_4, %c0_5] : memref<4x72x72xbf16, #tpu.memory_space<vmem>>, vector<1x72x72xbf16>
    %10 = vector.shape_cast %9 : vector<1x72x72xbf16> to vector<72x72xbf16>
    %cst_6 = arith.constant dense<0.000000e+00> : vector<72x128xf32>
    %11 = tpu.matmul %10, %6, %cst_6 {dimension_numbers = #tpu.dot_dimension_numbers<[1], [0], [0], [1], [0, 0, 1, 1], [], []>} : vector<72x72xbf16>, vector<72x128xbf16>, vector<72x128xf32> -> vector<72x128xf32>
    %c1 = arith.constant 1 : index
    %c0_7 = arith.constant 0 : index
    %c0_8 = arith.constant 0 : index
    %12 = vector.load %arg3[%c1, %c0_7, %c0_8] : memref<4x72x72xbf16, #tpu.memory_space<vmem>>, vector<1x72x72xbf16>
    %13 = vector.shape_cast %12 : vector<1x72x72xbf16> to vector<72x72xbf16>
    %cst_9 = arith.constant dense<0.000000e+00> : vector<72x128xf32>
    %14 = tpu.matmul %13, %8, %cst_9 {dimension_numbers = #tpu.dot_dimension_numbers<[1], [0], [0], [1], [0, 0, 1, 1], [], []>} : vector<72x72xbf16>, vector<72x128xbf16>, vector<72x128xf32> -> vector<72x128xf32>
    %15 = arith.addf %11, %14 : vector<72x128xf32>
    %c2 = arith.constant 2 : index
    %c0_10 = arith.constant 0 : index
    %c0_11 = arith.constant 0 : index
    %16 = vector.load %arg3[%c2, %c0_10, %c0_11] : memref<4x72x72xbf16, #tpu.memory_space<vmem>>, vector<1x72x72xbf16>
    %17 = vector.shape_cast %16 : vector<1x72x72xbf16> to vector<72x72xbf16>
    %cst_12 = arith.constant dense<0.000000e+00> : vector<72x128xf32>
    %18 = tpu.matmul %17, %6, %cst_12 {dimension_numbers = #tpu.dot_dimension_numbers<[1], [0], [0], [1], [0, 0, 1, 1], [], []>} : vector<72x72xbf16>, vector<72x128xbf16>, vector<72x128xf32> -> vector<72x128xf32>
    %c3 = arith.constant 3 : index
    %c0_13 = arith.constant 0 : index
    %c0_14 = arith.constant 0 : index
    %19 = vector.load %arg3[%c3, %c0_13, %c0_14] : memref<4x72x72xbf16, #tpu.memory_space<vmem>>, vector<1x72x72xbf16>
    %20 = vector.shape_cast %19 : vector<1x72x72xbf16> to vector<72x72xbf16>
    %cst_15 = arith.constant dense<0.000000e+00> : vector<72x128xf32>
    %21 = tpu.matmul %20, %8, %cst_15 {dimension_numbers = #tpu.dot_dimension_numbers<[1], [0], [0], [1], [0, 0, 1, 1], [], []>} : vector<72x72xbf16>, vector<72x128xbf16>, vector<72x128xf32> -> vector<72x128xf32>
    %22 = arith.addf %18, %21 : vector<72x128xf32>
    %23 = math.sqrt %15 : vector<72x128xf32>
    %cst_16 = arith.constant 1.000000e+00 : f32
    %24 = vector.broadcast %cst_16 : f32 to vector<72x128xf32>
    %25 = arith.addf %24, %15 : vector<72x128xf32>
    %26 = tpu.reciprocal %25 {approx = true} : vector<72x128xf32> -> vector<72x128xf32>
    %27 = arith.mulf %23, %26 : vector<72x128xf32>
    %28 = math.sqrt %22 : vector<72x128xf32>
    %cst_17 = arith.constant 1.000000e+00 : f32
    %29 = vector.broadcast %cst_17 : f32 to vector<72x128xf32>
    %30 = arith.addf %29, %22 : vector<72x128xf32>
    %31 = tpu.reciprocal %30 {approx = true} : vector<72x128xf32> -> vector<72x128xf32>
    %32 = arith.mulf %28, %31 : vector<72x128xf32>
    %33 = arith.mulf %3, %27 : vector<72x128xf32>
    %c0_18 = arith.constant 0 : index
    %c0_19 = arith.constant 0 : index
    %34 = vector.load %arg4[%c0_18, %c0_19] : memref<72x256xf32, #tpu.memory_space<vmem>>, vector<72x128xf32>
    tpu.vector_store %arg4[%c0_18, %c0_19], %33 {strides = array<i32>} : memref<72x256xf32, #tpu.memory_space<vmem>>, vector<72x128xf32>,
    %35 = arith.mulf %4, %32 : vector<72x128xf32>
    %c0_20 = arith.constant 0 : index
    %c128 = arith.constant 128 : index
    %36 = vector.load %arg4[%c0_20, %c128] : memref<72x256xf32, #tpu.memory_space<vmem>>, vector<72x128xf32>
    tpu.vector_store %arg4[%c0_20, %c128], %35 {strides = array<i32>} : memref<72x256xf32, #tpu.memory_space<vmem>>, vector<72x128xf32>,
    return
  }
  func.func @transform_0(%arg0: i32) -> (i32, i32) {
    %c0_i32 = arith.constant 0 : i32
    %c0_i32_0 = arith.constant 0 : i32
    return %arg0, %c0_i32 : i32, i32
  }
  func.func @transform_1(%arg0: i32) -> (i32, i32) {
    %c0_i32 = arith.constant 0 : i32
    %c0_i32_0 = arith.constant 0 : i32
    %c0_i32_1 = arith.constant 0 : i32
    return %c0_i32, %c0_i32_0 : i32, i32
  }
  func.func @transform_2(%arg0: i32) -> (i32, i32, i32) {
    %c0_i32 = arith.constant 0 : i32
    %c0_i32_0 = arith.constant 0 : i32
    %c0_i32_1 = arith.constant 0 : i32
    %c0_i32_2 = arith.constant 0 : i32
    return %c0_i32, %c0_i32_0, %c0_i32_1 : i32, i32, i32
  }
  func.func @transform_3(%arg0: i32) -> (i32, i32) {
    %c0_i32 = arith.constant 0 : i32
    %c0_i32_0 = arith.constant 0 : i32
    return %arg0, %c0_i32 : i32, i32
  }
}

</mosaic_0001>

<llo_original>
// kernel: primary_caps_forward.1
$region0: #{primary_caps_forward.1}
  #allocation0 [shape = 'u32[]', space=smem, size = 0x4, offset = 0x4, fixed_abs, tag = 'smem constant byte address 0x4 - core index']
  #allocation1 [shape = 'u32[144,128]{1,0:T(1,128)}', space=vmem, size = 0x12000, scoped, tag = 'internal scratch']
  %s0 = inlined_call_operand.vmem [shape: bf16[72,1408], index: 0, kind: input, shape index: {}]
  %s1 = inlined_call_operand.vmem [shape: bf16[1408,256], index: 1, kind: input, shape index: {}]
  %s2 = inlined_call_operand.vmem [shape: bf16[4,72,72], index: 2, kind: input, shape index: {}]
  %s3 = inlined_call_operand.vmem [shape: f32[72,256], index: 3, kind: output, shape index: {}]
  %s4 = sld [smem:[#allocation0]]
  $region22: #{primary_caps_forward.1} parent=0
    _
  %s6 = ssub.s32 1, %s4
  %s7 = scalar_select 0, %s6, %s4
  // Predicated region
  $region2: #{primary_caps_forward.1} parent=0 // pred_check
    _
  $region3: #{primary_caps_forward.1} parent=0 // pred_check_branch
    %9 = sbr.rel (0) target = $region5
  $region4: #{primary_caps_forward.1} parent=0 // pred_region
    _
  $region5: #{primary_caps_forward.1} parent=0 // pred_fallthru
    _
  // Predicated region
  $region6: #{primary_caps_forward.1} parent=0 // pred_check
    _
  $region7: #{primary_caps_forward.1} parent=0 // pred_check_branch
    %11 = sbr.rel (0) target = $region9
  $region8: #{primary_caps_forward.1} parent=0 // pred_region
    _
  $region9: #{primary_caps_forward.1} parent=0 // pred_fallthru
    _
  // Predicated region
  $region10: #{primary_caps_forward.1} parent=0 // pred_check
    _
  $region11: #{primary_caps_forward.1} parent=0 // pred_check_branch
    %13 = sbr.rel (0) target = $region13
  $region12: #{primary_caps_forward.1} parent=0 // pred_region
    _
  $region13: #{primary_caps_forward.1} parent=0 // pred_fallthru
    _
  %v15 = vld [vmem:[%s0] sm:$0xff]
  %v16 = vld [vmem:[%s0 + $0x8] sm:$0xff]
  %v17 = vld [vmem:[%s0 + $0x10] sm:$0xff]
  %v18 = vld [vmem:[%s0 + $0x18] sm:$0xff]
  %v19 = vld [vmem:[%s0 + $0x20] sm:$0xff]
  %v20 = vld [vmem:[%s0 + $0x28] sm:$0xf]
  %v21 = vld [vmem:[%s0 + $0x2c] sm:$0xff]
  %v22 = vld [vmem:[%s0 + $0x34] sm:$0xff]
  %v23 = vld [vmem:[%s0 + $0x3c] sm:$0xff]
  %v24 = vld [vmem:[%s0 + $0x44] sm:$0xff]
  %v25 = vld [vmem:[%s0 + $0x4c] sm:$0xff]
  %v26 = vld [vmem:[%s0 + $0x54] sm:$0xf]
  %v27 = vld [vmem:[%s0 + $0x58] sm:$0xff]
  %v28 = vld [vmem:[%s0 + $0x60] sm:$0xff]
  %v29 = vld [vmem:[%s0 + $0x68] sm:$0xff]
  %v30 = vld [vmem:[%s0 + $0x70] sm:$0xff]
  %v31 = vld [vmem:[%s0 + $0x78] sm:$0xff]
  %v32 = vld [vmem:[%s0 + $0x80] sm:$0xf]
  %v33 = vld [vmem:[%s0 + $0x84] sm:$0xff]
  %v34 = vld [vmem:[%s0 + $0x8c] sm:$0xff]
  %v35 = vld [vmem:[%s0 + $0x94] sm:$0xff]
  %v36 = vld [vmem:[%s0 + $0x9c] sm:$0xff]
  %v37 = vld [vmem:[%s0 + $0xa4] sm:$0xff]
  %v38 = vld [vmem:[%s0 + $0xac] sm:$0xf]
  %v39 = vld [vmem:[%s0 + $0xb0] sm:$0xff]
  %v40 = vld [vmem:[%s0 + $0xb8] sm:$0xff]
  %v41 = vld [vmem:[%s0 + $0xc0] sm:$0xff]
  %v42 = vld [vmem:[%s0 + $0xc8] sm:$0xff]
  %v43 = vld [vmem:[%s0 + $0xd0] sm:$0xff]
  %v44 = vld [vmem:[%s0 + $0xd8] sm:$0xf]
  %v45 = vld [vmem:[%s0 + $0xdc] sm:$0xff]
  %v46 = vld [vmem:[%s0 + $0xe4] sm:$0xff]
  %v47 = vld [vmem:[%s0 + $0xec] sm:$0xff]
  %v48 = vld [vmem:[%s0 + $0xf4] sm:$0xff]
  %v49 = vld [vmem:[%s0 + $0xfc] sm:$0xff]
  %v50 = vld [vmem:[%s0 + $0x104] sm:$0xf]
  %v51 = vld [vmem:[%s0 + $0x108] sm:$0xff]
  %v52 = vld [vmem:[%s0 + $0x110] sm:$0xff]
  %v53 = vld [vmem:[%s0 + $0x118] sm:$0xff]
  %v54 = vld [vmem:[%s0 + $0x120] sm:$0xff]
  %v55 = vld [vmem:[%s0 + $0x128] sm:$0xff]
  %v56 = vld [vmem:[%s0 + $0x130] sm:$0xf]
  %v57 = vld [vmem:[%s0 + $0x134] sm:$0xff]
  %v58 = vld [vmem:[%s0 + $0x13c] sm:$0xff]
  %v59 = vld [vmem:[%s0 + $0x144] sm:$0xff]
  %v60 = vld [vmem:[%s0 + $0x14c] sm:$0xff]
  %v61 = vld [vmem:[%s0 + $0x154] sm:$0xff]
  %v62 = vld [vmem:[%s0 + $0x15c] sm:$0xf]
  %v63 = vld [vmem:[%s0 + $0x160] sm:$0xff]
  %v64 = vld [vmem:[%s0 + $0x168] sm:$0xff]
  %v65 = vld [vmem:[%s0 + $0x170] sm:$0xff]
  %v66 = vld [vmem:[%s0 + $0x178] sm:$0xff]
  %v67 = vld [vmem:[%s0 + $0x180] sm:$0xff]
  %v68 = vld [vmem:[%s0 + $0x188] sm:$0xf]
  %v69 = vld [vmem:[%s1] sm:$0xff]
  %v70 = vld [vmem:[%s1 + $0x8] sm:$0xff]
  %v71 = vld [vmem:[%s1 + $0x10] sm:$0xff]
  %v72 = vld [vmem:[%s1 + $0x18] sm:$0xff]
  %v73 = vld [vmem:[%s1 + $0x20] sm:$0xff]
  %v74 = vld [vmem:[%s1 + $0x28] sm:$0xff]
  %v75 = vld [vmem:[%s1 + $0x30] sm:$0xff]
  %v76 = vld [vmem:[%s1 + $0x38] sm:$0xff]
  %v77 = vld [vmem:[%s1 + $0x40] sm:$0xff]
  %v78 = vld [vmem:[%s1 + $0x48] sm:$0xff]
  %v79 = vld [vmem:[%s1 + $0x50] sm:$0xff]
  %v80 = vld [vmem:[%s1 + $0x58] sm:$0xff]
  %v81 = vld [vmem:[%s1 + $0x60] sm:$0xff]
  %v82 = vld [vmem:[%s1 + $0x68] sm:$0xff]
  %v83 = vld [vmem:[%s1 + $0x70] sm:$0xff]
  %v84 = vld [vmem:[%s1 + $0x78] sm:$0xff]
  %v85 = vld [vmem:[%s1 + $0x80] sm:$0xff]
  %v86 = vld [vmem:[%s1 + $0x88] sm:$0xff]
  %v87 = vld [vmem:[%s1 + $0x90] sm:$0xff]
  %v88 = vld [vmem:[%s1 + $0x98] sm:$0xff]
  %v89 = vld [vmem:[%s1 + $0xa0] sm:$0xff]
  %v90 = vld [vmem:[%s1 + $0xa8] sm:$0xff]
  %v91 = vld [vmem:[%s1 + $0xb0] sm:$0xff]
  %v92 = vld [vmem:[%s1 + $0xb8] sm:$0xff]
  %v93 = vld [vmem:[%s1 + $0xc0] sm:$0xff]
  %v94 = vld [vmem:[%s1 + $0xc8] sm:$0xff]
  %v95 = vld [vmem:[%s1 + $0xd0] sm:$0xff]
  %v96 = vld [vmem:[%s1 + $0xd8] sm:$0xff]
  %v97 = vld [vmem:[%s1 + $0xe0] sm:$0xff]
  %v98 = vld [vmem:[%s1 + $0xe8] sm:$0xff]
  %v99 = vld [vmem:[%s1 + $0xf0] sm:$0xff]
  %v100 = vld [vmem:[%s1 + $0xf8] sm:$0xff]
  %v101 = vld [vmem:[%s1 + $0x100] sm:$0xff]
  %v102 = vld [vmem:[%s1 + $0x108] sm:$0xff]
  %v103 = vld [vmem:[%s1 + $0x110] sm:$0xff]
  %v104 = vld [vmem:[%s1 + $0x118] sm:$0xff]
  %v105 = vld [vmem:[%s1 + $0x120] sm:$0xff]
  %v106 = vld [vmem:[%s1 + $0x128] sm:$0xff]
  %v107 = vld [vmem:[%s1 + $0x130] sm:$0xff]
  %v108 = vld [vmem:[%s1 + $0x138] sm:$0xff]
  %v109 = vld [vmem:[%s1 + $0x140] sm:$0xff]
  %v110 = vld [vmem:[%s1 + $0x148] sm:$0xff]
  %v111 = vld [vmem:[%s1 + $0x150] sm:$0xff]
  %v112 = vld [vmem:[%s1 + $0x158] sm:$0xff]
  %v113 = vld [vmem:[%s1 + $0x160] sm:$0xff]
  %v114 = vld [vmem:[%s1 + $0x168] sm:$0xff]
  %v115 = vld [vmem:[%s1 + $0x170] sm:$0xff]
  %v116 = vld [vmem:[%s1 + $0x178] sm:$0xff]
  %v117 = vld [vmem:[%s1 + $0x180] sm:$0xff]
  %v118 = vld [vmem:[%s1 + $0x188] sm:$0xff]
  %v119 = vld [vmem:[%s1 + $0x190] sm:$0xff]
  %v120 = vld [vmem:[%s1 + $0x198] sm:$0xff]
  %v121 = vld [vmem:[%s1 + $0x1a0] sm:$0xff]
  %v122 = vld [vmem:[%s1 + $0x1a8] sm:$0xff]
  %v123 = vld [vmem:[%s1 + $0x1b0] sm:$0xff]
  %v124 = vld [vmem:[%s1 + $0x1b8] sm:$0xff]
  %v125 = vld [vmem:[%s1 + $0x1c0] sm:$0xff]
  %v126 = vld [vmem:[%s1 + $0x1c8] sm:$0xff]
  %v127 = vld [vmem:[%s1 + $0x1d0] sm:$0xff]
  %v128 = vld [vmem:[%s1 + $0x1d8] sm:$0xff]
  %v129 = vld [vmem:[%s1 + $0x1e0] sm:$0xff]
  %v130 = vld [vmem:[%s1 + $0x1e8] sm:$0xff]
  %v131 = vld [vmem:[%s1 + $0x1f0] sm:$0xff]
  %v132 = vld [vmem:[%s1 + $0x1f8] sm:$0xff]
  %v133 = vld [vmem:[%s1 + $0x200] sm:$0xff]
  %v134 = vld [vmem:[%s1 + $0x208] sm:$0xff]
  %v135 = vld [vmem:[%s1 + $0x210] sm:$0xff]
  %v136 = vld [vmem:[%s1 + $0x218] sm:$0xff]
  %v137 = vld [vmem:[%s1 + $0x220] sm:$0xff]
  %v138 = vld [vmem:[%s1 + $0x228] sm:$0xff]
  %v139 = vld [vmem:[%s1 + $0x230] sm:$0xff]
  %v140 = vld [vmem:[%s1 + $0x238] sm:$0xff]
  %v141 = vld [vmem:[%s1 + $0x240] sm:$0xff]
  %v142 = vld [vmem:[%s1 + $0x248] sm:$0xff]
  %v143 = vld [vmem:[%s1 + $0x250] sm:$0xff]
  %v144 = vld [vmem:[%s1 + $0x258] sm:$0xff]
  %v145 = vld [vmem:[%s1 + $0x260] sm:$0xff]
  %v146 = vld [vmem:[%s1 + $0x268] sm:$0xff]
  %v147 = vld [vmem:[%s1 + $0x270] sm:$0xff]
  %v148 = vld [vmem:[%s1 + $0x278] sm:$0xff]
  %v149 = vld [vmem:[%s1 + $0x280] sm:$0xff]
  %v150 = vld [vmem:[%s1 + $0x288] sm:$0xff]
  %v151 = vld [vmem:[%s1 + $0x290] sm:$0xff]
  %v152 = vld [vmem:[%s1 + $0x298] sm:$0xff]
  %v153 = vld [vmem:[%s1 + $0x2a0] sm:$0xff]
  %v154 = vld [vmem:[%s1 + $0x2a8] sm:$0xff]
  %v155 = vld [vmem:[%s1 + $0x2b0] sm:$0xff]
  %v156 = vld [vmem:[%s1 + $0x2b8] sm:$0xff]
  %v157 = vld [vmem:[%s1 + $0x2c0] sm:$0xff]
  %v158 = vld [vmem:[%s1 + $0x2c8] sm:$0xff]
  %v159 = vld [vmem:[%s1 + $0x2d0] sm:$0xff]
  %v160 = vld [vmem:[%s1 + $0x2d8] sm:$0xff]
  %v161 = vld [vmem:[%s1 + $0x2e0] sm:$0xff]
  %v162 = vld [vmem:[%s1 + $0x2e8] sm:$0xff]
  %v163 = vld [vmem:[%s1 + $0x2f0] sm:$0xff]
  %v164 = vld [vmem:[%s1 + $0x2f8] sm:$0xff]
  %v165 = vld [vmem:[%s1 + $0x300] sm:$0xff]
  %v166 = vld [vmem:[%s1 + $0x308] sm:$0xff]
  %v167 = vld [vmem:[%s1 + $0x310] sm:$0xff]
  %v168 = vld [vmem:[%s1 + $0x318] sm:$0xff]
  %v169 = vld [vmem:[%s1 + $0x320] sm:$0xff]
  %v170 = vld [vmem:[%s1 + $0x328] sm:$0xff]
  %v171 = vld [vmem:[%s1 + $0x330] sm:$0xff]
  %v172 = vld [vmem:[%s1 + $0x338] sm:$0xff]
  %v173 = vld [vmem:[%s1 + $0x340] sm:$0xff]
  %v174 = vld [vmem:[%s1 + $0x348] sm:$0xff]
  %v175 = vld [vmem:[%s1 + $0x350] sm:$0xff]
  %v176 = vld [vmem:[%s1 + $0x358] sm:$0xff]
  %v177 = vld [vmem:[%s1 + $0x360] sm:$0xff]
  %v178 = vld [vmem:[%s1 + $0x368] sm:$0xff]
  %v179 = vld [vmem:[%s1 + $0x370] sm:$0xff]
  %v180 = vld [vmem:[%s1 + $0x378] sm:$0xff]
  %v181 = vld [vmem:[%s1 + $0x380] sm:$0xff]
  %v182 = vld [vmem:[%s1 + $0x388] sm:$0xff]
  %v183 = vld [vmem:[%s1 + $0x390] sm:$0xff]
  %v184 = vld [vmem:[%s1 + $0x398] sm:$0xff]
  %v185 = vld [vmem:[%s1 + $0x3a0] sm:$0xff]
  %v186 = vld [vmem:[%s1 + $0x3a8] sm:$0xff]
  %v187 = vld [vmem:[%s1 + $0x3b0] sm:$0xff]
  %v188 = vld [vmem:[%s1 + $0x3b8] sm:$0xff]
  %v189 = vld [vmem:[%s1 + $0x3c0] sm:$0xff]
  %v190 = vld [vmem:[%s1 + $0x3c8] sm:$0xff]
  %v191 = vld [vmem:[%s1 + $0x3d0] sm:$0xff]
  %v192 = vld [vmem:[%s1 + $0x3d8] sm:$0xff]
  %v193 = vld [vmem:[%s1 + $0x3e0] sm:$0xff]
  %v194 = vld [vmem:[%s1 + $0x3e8] sm:$0xff]
  %v195 = vld [vmem:[%s1 + $0x3f0] sm:$0xff]
  %v196 = vld [vmem:[%s1 + $0x3f8] sm:$0xff]
  %v197 = vld [vmem:[%s1 + $0x400] sm:$0xff]
  %v198 = vld [vmem:[%s1 + $0x408] sm:$0xff]
  %v199 = vld [vmem:[%s1 + $0x410] sm:$0xff]
  %v200 = vld [vmem:[%s1 + $0x418] sm:$0xff]
  %v201 = vld [vmem:[%s1 + $0x420] sm:$0xff]
  %v202 = vld [vmem:[%s1 + $0x428] sm:$0xff]
  %v203 = vld [vmem:[%s1 + $0x430] sm:$0xff]
  %v204 = vld [vmem:[%s1 + $0x438] sm:$0xff]
  %v205 = vld [vmem:[%s1 + $0x440] sm:$0xff]
  %v206 = vld [vmem:[%s1 + $0x448] sm:$0xff]
  %v207 = vld [vmem:[%s1 + $0x450] sm:$0xff]
  %v208 = vld [vmem:[%s1 + $0x458] sm:$0xff]
  %v209 = vld [vmem:[%s1 + $0x460] sm:$0xff]
  %v210 = vld [vmem:[%s1 + $0x468] sm:$0xff]
  %v211 = vld [vmem:[%s1 + $0x470] sm:$0xff]
  %v212 = vld [vmem:[%s1 + $0x478] sm:$0xff]
  %v213 = vld [vmem:[%s1 + $0x480] sm:$0xff]
  %v214 = vld [vmem:[%s1 + $0x488] sm:$0xff]
  %v215 = vld [vmem:[%s1 + $0x490] sm:$0xff]
  %v216 = vld [vmem:[%s1 + $0x498] sm:$0xff]
  %v217 = vld [vmem:[%s1 + $0x4a0] sm:$0xff]
  %v218 = vld [vmem:[%s1 + $0x4a8] sm:$0xff]
  %v219 = vld [vmem:[%s1 + $0x4b0] sm:$0xff]
  %v220 = vld [vmem:[%s1 + $0x4b8] sm:$0xff]
  %v221 = vld [vmem:[%s1 + $0x4c0] sm:$0xff]
  %v222 = vld [vmem:[%s1 + $0x4c8] sm:$0xff]
  %v223 = vld [vmem:[%s1 + $0x4d0] sm:$0xff]
  %v224 = vld [vmem:[%s1 + $0x4d8] sm:$0xff]
  %v225 = vld [vmem:[%s1 + $0x4e0] sm:$0xff]
  %v226 = vld [vmem:[%s1 + $0x4e8] sm:$0xff]
  %v227 = vld [vmem:[%s1 + $0x4f0] sm:$0xff]
  %v228 = vld [vmem:[%s1 + $0x4f8] sm:$0xff]
  %v229 = vld [vmem:[%s1 + $0x500] sm:$0xff]
  %v230 = vld [vmem:[%s1 + $0x508] sm:$0xff]
  %v231 = vld [vmem:[%s1 + $0x510] sm:$0xff]
  %v232 = vld [vmem:[%s1 + $0x518] sm:$0xff]
  %v233 = vld [vmem:[%s1 + $0x520] sm:$0xff]
  %v234 = vld [vmem:[%s1 + $0x528] sm:$0xff]
  %v235 = vld [vmem:[%s1 + $0x530] sm:$0xff]
  %v236 = vld [vmem:[%s1 + $0x538] sm:$0xff]
  %v237 = vld [vmem:[%s1 + $0x540] sm:$0xff]
  %v238 = vld [vmem:[%s1 + $0x548] sm:$0xff]
  %v239 = vld [vmem:[%s1 + $0x550] sm:$0xff]
  %v240 = vld [vmem:[%s1 + $0x558] sm:$0xff]
  %v241 = vld [vmem:[%s1 + $0x560] sm:$0xff]
  %v242 = vld [vmem:[%s1 + $0x568] sm:$0xff]
  %v243 = vld [vmem:[%s1 + $0x570] sm:$0xff]
  %v244 = vld [vmem:[%s1 + $0x578] sm:$0xff]
  %v299 = vunpack.c.l.b16 %v15
  %v300 = vunpack.c.h.b16 %v15
  %v301 = vunpack.c.l.b16 %v16
  %v302 = vunpack.c.h.b16 %v16
  %v303 = vunpack.c.l.b16 %v17
  %v304 = vunpack.c.h.b16 %v17
  %v305 = vunpack.c.l.b16 %v18
  %v306 = vunpack.c.h.b16 %v18
  %v307 = vunpack.c.l.b16 %v19
  %v308 = vunpack.c.h.b16 %v19
  %v309 = vunpack.c.l.b16 %v20
  %v310 = vunpack.c.l.b16 %v21
  %v311 = vunpack.c.h.b16 %v21
  %v312 = vunpack.c.l.b16 %v22
  %v313 = vunpack.c.h.b16 %v22
  %v314 = vunpack.c.l.b16 %v23
  %v315 = vunpack.c.h.b16 %v23
  %v316 = vunpack.c.l.b16 %v24
  %v317 = vunpack.c.h.b16 %v24
  %v318 = vunpack.c.l.b16 %v25
  %v319 = vunpack.c.h.b16 %v25
  %v320 = vunpack.c.l.b16 %v26
  %v321 = vunpack.c.l.b16 %v27
  %v322 = vunpack.c.h.b16 %v27
  %v323 = vunpack.c.l.b16 %v28
  %v324 = vunpack.c.h.b16 %v28
  %v325 = vunpack.c.l.b16 %v29
  %v326 = vunpack.c.h.b16 %v29
  %v327 = vunpack.c.l.b16 %v30
  %v328 = vunpack.c.h.b16 %v30
  %v329 = vunpack.c.l.b16 %v31
  %v330 = vunpack.c.h.b16 %v31
  %v331 = vunpack.c.l.b16 %v32
  %v332 = vunpack.c.l.b16 %v33
  %v333 = vunpack.c.h.b16 %v33
  %v334 = vunpack.c.l.b16 %v34
  %v335 = vunpack.c.h.b16 %v34
  %v336 = vunpack.c.l.b16 %v35
  %v337 = vunpack.c.h.b16 %v35
  %v338 = vunpack.c.l.b16 %v36
  %v339 = vunpack.c.h.b16 %v36
  %v340 = vunpack.c.l.b16 %v37
  %v341 = vunpack.c.h.b16 %v37
  %v342 = vunpack.c.l.b16 %v38
  %v343 = vunpack.c.l.b16 %v39
  %v344 = vunpack.c.h.b16 %v39
  %v345 = vunpack.c.l.b16 %v40
  %v346 = vunpack.c.h.b16 %v40
  %v347 = vunpack.c.l.b16 %v41
  %v348 = vunpack.c.h.b16 %v41
  %v349 = vunpack.c.l.b16 %v42
  %v350 = vunpack.c.h.b16 %v42
  %v351 = vunpack.c.l.b16 %v43
  %v352 = vunpack.c.h.b16 %v43
  %v353 = vunpack.c.l.b16 %v44
  %v354 = vunpack.c.l.b16 %v45
  %v355 = vunpack.c.h.b16 %v45
  %v356 = vunpack.c.l.b16 %v46
  %v357 = vunpack.c.h.b16 %v46
  %v358 = vunpack.c.l.b16 %v47
  %v359 = vunpack.c.h.b16 %v47
  %v360 = vunpack.c.l.b16 %v48
  %v361 = vunpack.c.h.b16 %v48
  %v362 = vunpack.c.l.b16 %v49
  %v363 = vunpack.c.h.b16 %v49
  %v364 = vunpack.c.l.b16 %v50
  %v365 = vunpack.c.l.b16 %v51
  %v366 = vunpack.c.h.b16 %v51
  %v367 = vunpack.c.l.b16 %v52
  %v368 = vunpack.c.h.b16 %v52
  %v369 = vunpack.c.l.b16 %v53
  %v370 = vunpack.c.h.b16 %v53
  %v371 = vunpack.c.l.b16 %v54
  %v372 = vunpack.c.h.b16 %v54
  %v373 = vunpack.c.l.b16 %v55
  %v374 = vunpack.c.h.b16 %v55
  %v375 = vunpack.c.l.b16 %v56
  %v376 = vunpack.c.l.b16 %v57
  %v377 = vunpack.c.h.b16 %v57
  %v378 = vunpack.c.l.b16 %v58
  %v379 = vunpack.c.h.b16 %v58
  %v380 = vunpack.c.l.b16 %v59
  %v381 = vunpack.c.h.b16 %v59
  %v382 = vunpack.c.l.b16 %v60
  %v383 = vunpack.c.h.b16 %v60
  %v384 = vunpack.c.l.b16 %v61
  %v385 = vunpack.c.h.b16 %v61
  %v386 = vunpack.c.l.b16 %v62
  %v387 = vunpack.c.l.b16 %v63
  %v388 = vunpack.c.h.b16 %v63
  %v389 = vunpack.c.l.b16 %v64
  %v390 = vunpack.c.h.b16 %v64
  %v391 = vunpack.c.l.b16 %v65
  %v392 = vunpack.c.h.b16 %v65
  %v393 = vunpack.c.l.b16 %v66
  %v394 = vunpack.c.h.b16 %v66
  %v395 = vunpack.c.l.b16 %v67
  %v396 = vunpack.c.h.b16 %v67
  %v397 = vunpack.c.l.b16 %v68
  %v398 = vpack.c.b16 %v310, %v299
  %v399 = vpack.c.b16 %v311, %v300
  %v400 = vpack.c.b16 %v312, %v301
  %v401 = vpack.c.b16 %v313, %v302
  %v402 = vpack.c.b16 %v314, %v303
  %v403 = vpack.c.b16 %v315, %v304
  %v404 = vpack.c.b16 %v316, %v305
  %v405 = vpack.c.b16 %v317, %v306
  %v406 = vpack.c.b16 %v318, %v307
  %v407 = vpack.c.b16 %v319, %v308
  %v408 = vpack.c.b16 %v320, %v309
  %v409 = vpack.c.b16 %v332, %v321
  %v410 = vpack.c.b16 %v333, %v322
  %v411 = vpack.c.b16 %v334, %v323
  %v412 = vpack.c.b16 %v335, %v324
  %v413 = vpack.c.b16 %v336, %v325
  %v414 = vpack.c.b16 %v337, %v326
  %v415 = vpack.c.b16 %v338, %v327
  %v416 = vpack.c.b16 %v339, %v328
  %v417 = vpack.c.b16 %v340, %v329
  %v418 = vpack.c.b16 %v341, %v330
  %v419 = vpack.c.b16 %v342, %v331
  %v420 = vpack.c.b16 %v354, %v343
  %v421 = vpack.c.b16 %v355, %v344
  %v422 = vpack.c.b16 %v356, %v345
  %v423 = vpack.c.b16 %v357, %v346
  %v424 = vpack.c.b16 %v358, %v347
  %v425 = vpack.c.b16 %v359, %v348
  %v426 = vpack.c.b16 %v360, %v349
  %v427 = vpack.c.b16 %v361, %v350
  %v428 = vpack.c.b16 %v362, %v351
  %v429 = vpack.c.b16 %v363, %v352
  %v430 = vpack.c.b16 %v364, %v353
  %v431 = vpack.c.b16 %v376, %v365
  %v432 = vpack.c.b16 %v377, %v366
  %v433 = vpack.c.b16 %v378, %v367
  %v434 = vpack.c.b16 %v379, %v368
  %v435 = vpack.c.b16 %v380, %v369
  %v436 = vpack.c.b16 %v381, %v370
  %v437 = vpack.c.b16 %v382, %v371
  %v438 = vpack.c.b16 %v383, %v372
  %v439 = vpack.c.b16 %v384, %v373
  %v440 = vpack.c.b16 %v385, %v374
  %v441 = vpack.c.b16 %v386, %v375
  %v442 = vpack.c.b16 %v387, %v387
  %v443 = vpack.c.b16 %v388, %v388
  %v444 = vpack.c.b16 %v389, %v389
  %v445 = vpack.c.b16 %v390, %v390
  %v446 = vpack.c.b16 %v391, %v391
  %v447 = vpack.c.b16 %v392, %v392
  %v448 = vpack.c.b16 %v393, %v393
  %v449 = vpack.c.b16 %v394, %v394
  %v450 = vpack.c.b16 %v395, %v395
  %v451 = vpack.c.b16 %v396, %v396
  %v452 = vpack.c.b16 %v397, %v397
  %v684 = vunpack.c.l.b16 %v69
  %v685 = vunpack.c.h.b16 %v69
  %v686 = vunpack.c.l.b16 %v70
  %v687 = vunpack.c.h.b16 %v70
  %v688 = vunpack.c.l.b16 %v71
  %v689 = vunpack.c.h.b16 %v71
  %v690 = vunpack.c.l.b16 %v72
  %v691 = vunpack.c.h.b16 %v72
  %v692 = vunpack.c.l.b16 %v73
  %v693 = vunpack.c.h.b16 %v73
  %v694 = vunpack.c.l.b16 %v74
  %v695 = vunpack.c.h.b16 %v74
  %v696 = vunpack.c.l.b16 %v75
  %v697 = vunpack.c.h.b16 %v75
  %v698 = vunpack.c.l.b16 %v76
  %v699 = vunpack.c.h.b16 %v76
  %v700 = vunpack.c.l.b16 %v77
  %v701 = vunpack.c.h.b16 %v77
  %v702 = vunpack.c.l.b16 %v78
  %v703 = vunpack.c.h.b16 %v78
  %v704 = vunpack.c.l.b16 %v79
  %v705 = vunpack.c.h.b16 %v79
  %v706 = vunpack.c.l.b16 %v80
  %v707 = vunpack.c.h.b16 %v80
  %v708 = vunpack.c.l.b16 %v81
  %v709 = vunpack.c.h.b16 %v81
  %v710 = vunpack.c.l.b16 %v82
  %v711 = vunpack.c.h.b16 %v82
  %v712 = vunpack.c.l.b16 %v83
  %v713 = vunpack.c.h.b16 %v83
  %v714 = vunpack.c.l.b16 %v84
  %v715 = vunpack.c.h.b16 %v84
  %v716 = vunpack.c.l.b16 %v85
  %v717 = vunpack.c.h.b16 %v85
  %v718 = vunpack.c.l.b16 %v86
  %v719 = vunpack.c.h.b16 %v86
  %v720 = vunpack.c.l.b16 %v87
  %v721 = vunpack.c.h.b16 %v87
  %v722 = vunpack.c.l.b16 %v88
  %v723 = vunpack.c.h.b16 %v88
  %v724 = vunpack.c.l.b16 %v89
  %v725 = vunpack.c.h.b16 %v89
  %v726 = vunpack.c.l.b16 %v90
  %v727 = vunpack.c.h.b16 %v90
  %v728 = vunpack.c.l.b16 %v91
  %v729 = vunpack.c.h.b16 %v91
  %v730 = vunpack.c.l.b16 %v92
  %v731 = vunpack.c.h.b16 %v92
  %v732 = vunpack.c.l.b16 %v93
  %v733 = vunpack.c.h.b16 %v93
  %v734 = vunpack.c.l.b16 %v94
  %v735 = vunpack.c.h.b16 %v94
  %v736 = vunpack.c.l.b16 %v95
  %v737 = vunpack.c.h.b16 %v95
  %v738 = vunpack.c.l.b16 %v96
  %v739 = vunpack.c.h.b16 %v96
  %v740 = vunpack.c.l.b16 %v97
  %v741 = vunpack.c.h.b16 %v97
  %v742 = vunpack.c.l.b16 %v98
  %v743 = vunpack.c.h.b16 %v98
  %v744 = vunpack.c.l.b16 %v99
  %v745 = vunpack.c.h.b16 %v99
  %v746 = vunpack.c.l.b16 %v100
  %v747 = vunpack.c.h.b16 %v100
  %v748 = vunpack.c.l.b16 %v101
  %v749 = vunpack.c.h.b16 %v101
  %v750 = vunpack.c.l.b16 %v102
  %v751 = vunpack.c.h.b16 %v102
  %v752 = vunpack.c.l.b16 %v103
  %v753 = vunpack.c.h.b16 %v103
  %v754 = vunpack.c.l.b16 %v104
  %v755 = vunpack.c.h.b16 %v104
  %v756 = vunpack.c.l.b16 %v105
  %v757 = vunpack.c.h.b16 %v105
  %v758 = vunpack.c.l.b16 %v106
  %v759 = vunpack.c.h.b16 %v106
  %v760 = vunpack.c.l.b16 %v107
  %v761 = vunpack.c.h.b16 %v107
  %v762 = vunpack.c.l.b16 %v108
  %v763 = vunpack.c.h.b16 %v108
  %v764 = vunpack.c.l.b16 %v109
  %v765 = vunpack.c.h.b16 %v109
  %v766 = vunpack.c.l.b16 %v110
  %v767 = vunpack.c.h.b16 %v110
  %v768 = vunpack.c.l.b16 %v111
  %v769 = vunpack.c.h.b16 %v111
  %v770 = vunpack.c.l.b16 %v112
  %v771 = vunpack.c.h.b16 %v112
  %v772 = vunpack.c.l.b16 %v113
  %v773 = vunpack.c.h.b16 %v113
  %v774 = vunpack.c.l.b16 %v114
  %v775 = vunpack.c.h.b16 %v114
  %v776 = vunpack.c.l.b16 %v115
  %v777 = vunpack.c.h.b16 %v115
  %v778 = vunpack.c.l.b16 %v116
  %v779 = vunpack.c.h.b16 %v116
  %v780 = vunpack.c.l.b16 %v117
  %v781 = vunpack.c.h.b16 %v117
  %v782 = vunpack.c.l.b16 %v118
  %v783 = vunpack.c.h.b16 %v118
  %v784 = vunpack.c.l.b16 %v119
  %v785 = vunpack.c.h.b16 %v119
  %v786 = vunpack.c.l.b16 %v120
  %v787 = vunpack.c.h.b16 %v120
  %v788 = vunpack.c.l.b16 %v121
  %v789 = vunpack.c.h.b16 %v121
  %v790 = vunpack.c.l.b16 %v122
  %v791 = vunpack.c.h.b16 %v122
  %v792 = vunpack.c.l.b16 %v123
  %v793 = vunpack.c.h.b16 %v123
  %v794 = vunpack.c.l.b16 %v124
  %v795 = vunpack.c.h.b16 %v124
  %v796 = vunpack.c.l.b16 %v125
  %v797 = vunpack.c.h.b16 %v125
  %v798 = vunpack.c.l.b16 %v126
  %v799 = vunpack.c.h.b16 %v126
  %v800 = vunpack.c.l.b16 %v127
  %v801 = vunpack.c.h.b16 %v127
  %v802 = vunpack.c.l.b16 %v128
  %v803 = vunpack.c.h.b16 %v128
  %v804 = vunpack.c.l.b16 %v129
  %v805 = vunpack.c.h.b16 %v129
  %v806 = vunpack.c.l.b16 %v130
  %v807 = vunpack.c.h.b16 %v130
  %v808 = vunpack.c.l.b16 %v131
  %v809 = vunpack.c.h.b16 %v131
  %v810 = vunpack.c.l.b16 %v132
  %v811 = vunpack.c.h.b16 %v132
  %v812 = vunpack.c.l.b16 %v133
  %v813 = vunpack.c.h.b16 %v133
  %v814 = vunpack.c.l.b16 %v134
  %v815 = vunpack.c.h.b16 %v134
  %v816 = vunpack.c.l.b16 %v135
  %v817 = vunpack.c.h.b16 %v135
  %v818 = vunpack.c.l.b16 %v136
  %v819 = vunpack.c.h.b16 %v136
  %v820 = vunpack.c.l.b16 %v137
  %v821 = vunpack.c.h.b16 %v137
  %v822 = vunpack.c.l.b16 %v138
  %v823 = vunpack.c.h.b16 %v138
  %v824 = vunpack.c.l.b16 %v139
  %v825 = vunpack.c.h.b16 %v139
  %v826 = vunpack.c.l.b16 %v140
  %v827 = vunpack.c.h.b16 %v140
  %v828 = vunpack.c.l.b16 %v141
  %v829 = vunpack.c.h.b16 %v141
  %v830 = vunpack.c.l.b16 %v142
  %v831 = vunpack.c.h.b16 %v142
  %v832 = vunpack.c.l.b16 %v143
  %v833 = vunpack.c.h.b16 %v143
  %v834 = vunpack.c.l.b16 %v144
  %v835 = vunpack.c.h.b16 %v144
  %v836 = vunpack.c.l.b16 %v145
  %v837 = vunpack.c.h.b16 %v145
  %v838 = vunpack.c.l.b16 %v146
  %v839 = vunpack.c.h.b16 %v146
  %v840 = vunpack.c.l.b16 %v147
  %v841 = vunpack.c.h.b16 %v147
  %v842 = vunpack.c.l.b16 %v148
  %v843 = vunpack.c.h.b16 %v148
  %v844 = vunpack.c.l.b16 %v149
  %v845 = vunpack.c.h.b16 %v149
  %v846 = vunpack.c.l.b16 %v150
  %v847 = vunpack.c.h.b16 %v150
  %v848 = vunpack.c.l.b16 %v151
  %v849 = vunpack.c.h.b16 %v151
  %v850 = vunpack.c.l.b16 %v152
  %v851 = vunpack.c.h.b16 %v152
  %v852 = vunpack.c.l.b16 %v153
  %v853 = vunpack.c.h.b16 %v153
  %v854 = vunpack.c.l.b16 %v154
  %v855 = vunpack.c.h.b16 %v154
  %v856 = vunpack.c.l.b16 %v155
  %v857 = vunpack.c.h.b16 %v155
  %v858 = vunpack.c.l.b16 %v156
  %v859 = vunpack.c.h.b16 %v156
  %v860 = vunpack.c.l.b16 %v157
  %v861 = vunpack.c.h.b16 %v157
  %v862 = vunpack.c.l.b16 %v158
  %v863 = vunpack.c.h.b16 %v158
  %v864 = vunpack.c.l.b16 %v159
  %v865 = vunpack.c.h.b16 %v159
  %v866 = vunpack.c.l.b16 %v160
  %v867 = vunpack.c.h.b16 %v160
  %v868 = vunpack.c.l.b16 %v161
  %v869 = vunpack.c.h.b16 %v161
  %v870 = vunpack.c.l.b16 %v162
  %v871 = vunpack.c.h.b16 %v162
  %v872 = vunpack.c.l.b16 %v163
  %v873 = vunpack.c.h.b16 %v163
  %v874 = vunpack.c.l.b16 %v164
  %v875 = vunpack.c.h.b16 %v164
  %v876 = vunpack.c.l.b16 %v165
  %v877 = vunpack.c.h.b16 %v165
  %v878 = vunpack.c.l.b16 %v166
  %v879 = vunpack.c.h.b16 %v166
  %v880 = vunpack.c.l.b16 %v167
  %v881 = vunpack.c.h.b16 %v167
  %v882 = vunpack.c.l.b16 %v168
  %v883 = vunpack.c.h.b16 %v168
  %v884 = vunpack.c.l.b16 %v169
  %v885 = vunpack.c.h.b16 %v169
  %v886 = vunpack.c.l.b16 %v170
  %v887 = vunpack.c.h.b16 %v170
  %v888 = vunpack.c.l.b16 %v171
  %v889 = vunpack.c.h.b16 %v171
  %v890 = vunpack.c.l.b16 %v172
  %v891 = vunpack.c.h.b16 %v172
  %v892 = vunpack.c.l.b16 %v173
  %v893 = vunpack.c.h.b16 %v173
  %v894 = vunpack.c.l.b16 %v174
  %v895 = vunpack.c.h.b16 %v174
  %v896 = vunpack.c.l.b16 %v175
  %v897 = vunpack.c.h.b16 %v175
  %v898 = vunpack.c.l.b16 %v176
  %v899 = vunpack.c.h.b16 %v176
  %v900 = vunpack.c.l.b16 %v177
  %v901 = vunpack.c.h.b16 %v177
  %v902 = vunpack.c.l.b16 %v178
  %v903 = vunpack.c.h.b16 %v178
  %v904 = vunpack.c.l.b16 %v179
  %v905 = vunpack.c.h.b16 %v179
  %v906 = vunpack.c.l.b16 %v180
  %v907 = vunpack.c.h.b16 %v180
  %v908 = vunpack.c.l.b16 %v181
  %v909 = vunpack.c.h.b16 %v181
  %v910 = vunpack.c.l.b16 %v182
  %v911 = vunpack.c.h.b16 %v182
  %v912 = vunpack.c.l.b16 %v183
  %v913 = vunpack.c.h.b16 %v183
  %v914 = vunpack.c.l.b16 %v184
  %v915 = vunpack.c.h.b16 %v184
  %v916 = vunpack.c.l.b16 %v185
  %v917 = vunpack.c.h.b16 %v185
  %v918 = vunpack.c.l.b16 %v186
  %v919 = vunpack.c.h.b16 %v186
  %v920 = vunpack.c.l.b16 %v187
  %v921 = vunpack.c.h.b16 %v187
  %v922 = vunpack.c.l.b16 %v188
  %v923 = vunpack.c.h.b16 %v188
  %v924 = vunpack.c.l.b16 %v189
  %v925 = vunpack.c.h.b16 %v189
  %v926 = vunpack.c.l.b16 %v190
  %v927 = vunpack.c.h.b16 %v190
  %v928 = vunpack.c.l.b16 %v191
  %v929 = vunpack.c.h.b16 %v191
  %v930 = vunpack.c.l.b16 %v192
  %v931 = vunpack.c.h.b16 %v192
  %v932 = vunpack.c.l.b16 %v193
  %v933 = vunpack.c.h.b16 %v193
  %v934 = vunpack.c.l.b16 %v194
  %v935 = vunpack.c.h.b16 %v194
  %v936 = vunpack.c.l.b16 %v195
  %v937 = vunpack.c.h.b16 %v195
  %v938 = vunpack.c.l.b16 %v196
  %v939 = vunpack.c.h.b16 %v196
  %v940 = vunpack.c.l.b16 %v197
  %v941 = vunpack.c.h.b16 %v197
  %v942 = vunpack.c.l.b16 %v198
  %v943 = vunpack.c.h.b16 %v198
  %v944 = vunpack.c.l.b16 %v199
  %v945 = vunpack.c.h.b16 %v199
  %v946 = vunpack.c.l.b16 %v200
  %v947 = vunpack.c.h.b16 %v200
  %v948 = vunpack.c.l.b16 %v201
  %v949 = vunpack.c.h.b16 %v201
  %v950 = vunpack.c.l.b16 %v202
  %v951 = vunpack.c.h.b16 %v202
  %v952 = vunpack.c.l.b16 %v203
  %v953 = vunpack.c.h.b16 %v203
  %v954 = vunpack.c.l.b16 %v204
  %v955 = vunpack.c.h.b16 %v204
  %v956 = vunpack.c.l.b16 %v205
  %v957 = vunpack.c.h.b16 %v205
  %v958 = vunpack.c.l.b16 %v206
  %v959 = vunpack.c.h.b16 %v206
  %v960 = vunpack.c.l.b16 %v207
  %v961 = vunpack.c.h.b16 %v207
  %v962 = vunpack.c.l.b16 %v208
  %v963 = vunpack.c.h.b16 %v208
  %v964 = vunpack.c.l.b16 %v209
  %v965 = vunpack.c.h.b16 %v209
  %v966 = vunpack.c.l.b16 %v210
  %v967 = vunpack.c.h.b16 %v210
  %v968 = vunpack.c.l.b16 %v211
  %v969 = vunpack.c.h.b16 %v211
  %v970 = vunpack.c.l.b16 %v212
  %v971 = vunpack.c.h.b16 %v212
  %v972 = vunpack.c.l.b16 %v213
  %v973 = vunpack.c.h.b16 %v213
  %v974 = vunpack.c.l.b16 %v214
  %v975 = vunpack.c.h.b16 %v214
  %v976 = vunpack.c.l.b16 %v215
  %v977 = vunpack.c.h.b16 %v215
  %v978 = vunpack.c.l.b16 %v216
  %v979 = vunpack.c.h.b16 %v216
  %v980 = vunpack.c.l.b16 %v217
  %v981 = vunpack.c.h.b16 %v217
  %v982 = vunpack.c.l.b16 %v218
  %v983 = vunpack.c.h.b16 %v218
  %v984 = vunpack.c.l.b16 %v219
  %v985 = vunpack.c.h.b16 %v219
  %v986 = vunpack.c.l.b16 %v220
  %v987 = vunpack.c.h.b16 %v220
  %v988 = vunpack.c.l.b16 %v221
  %v989 = vunpack.c.h.b16 %v221
  %v990 = vunpack.c.l.b16 %v222
  %v991 = vunpack.c.h.b16 %v222
  %v992 = vunpack.c.l.b16 %v223
  %v993 = vunpack.c.h.b16 %v223
  %v994 = vunpack.c.l.b16 %v224
  %v995 = vunpack.c.h.b16 %v224
  %v996 = vunpack.c.l.b16 %v225
  %v997 = vunpack.c.h.b16 %v225
  %v998 = vunpack.c.l.b16 %v226
  %v999 = vunpack.c.h.b16 %v226
  %v1000 = vunpack.c.l.b16 %v227
  %v1001 = vunpack.c.h.b16 %v227
  %v1002 = vunpack.c.l.b16 %v228
  %v1003 = vunpack.c.h.b16 %v228
  %v1004 = vunpack.c.l.b16 %v229
  %v1005 = vunpack.c.h.b16 %v229
  %v1006 = vunpack.c.l.b16 %v230
  %v1007 = vunpack.c.h.b16 %v230
  %v1008 = vunpack.c.l.b16 %v231
  %v1009 = vunpack.c.h.b16 %v231
  %v1010 = vunpack.c.l.b16 %v232
  %v1011 = vunpack.c.h.b16 %v232
  %v1012 = vunpack.c.l.b16 %v233
  %v1013 = vunpack.c.h.b16 %v233
  %v1014 = vunpack.c.l.b16 %v234
  %v1015 = vunpack.c.h.b16 %v234
  %v1016 = vunpack.c.l.b16 %v235
  %v1017 = vunpack.c.h.b16 %v235
  %v1018 = vunpack.c.l.b16 %v236
  %v1019 = vunpack.c.h.b16 %v236
  %v1020 = vunpack.c.l.b16 %v237
  %v1021 = vunpack.c.h.b16 %v237
  %v1022 = vunpack.c.l.b16 %v238
  %v1023 = vunpack.c.h.b16 %v238
  %v1024 = vunpack.c.l.b16 %v239
  %v1025 = vunpack.c.h.b16 %v239
  %v1026 = vunpack.c.l.b16 %v240
  %v1027 = vunpack.c.h.b16 %v240
  %v1028 = vunpack.c.l.b16 %v241
  %v1029 = vunpack.c.h.b16 %v241
  %v1030 = vunpack.c.l.b16 %v242
  %v1031 = vunpack.c.h.b16 %v242
  %v1032 = vunpack.c.l.b16 %v243
  %v1033 = vunpack.c.h.b16 %v243
  %v1034 = vunpack.c.l.b16 %v244
  %v1035 = vunpack.c.h.b16 %v244
  %v1036 = vpack.c.b16 %v686, %v684
  %v1037 = vpack.c.b16 %v687, %v685
  %v1038 = vpack.c.b16 %v690, %v688
  %v1039 = vpack.c.b16 %v691, %v689
  %v1040 = vpack.c.b16 %v694, %v692
  %v1041 = vpack.c.b16 %v695, %v693
  %v1042 = vpack.c.b16 %v698, %v696
  %v1043 = vpack.c.b16 %v699, %v697
  %v1044 = vpack.c.b16 %v702, %v700
  %v1045 = vpack.c.b16 %v703, %v701
  %v1046 = vpack.c.b16 %v706, %v704
  %v1047 = vpack.c.b16 %v707, %v705
  %v1048 = vpack.c.b16 %v710, %v708
  %v1049 = vpack.c.b16 %v711, %v709
  %v1050 = vpack.c.b16 %v714, %v712
  %v1051 = vpack.c.b16 %v715, %v713
  %v1052 = vpack.c.b16 %v718, %v716
  %v1053 = vpack.c.b16 %v719, %v717
  %v1054 = vpack.c.b16 %v722, %v720
  %v1055 = vpack.c.b16 %v723, %v721
  %v1056 = vpack.c.b16 %v726, %v724
  %v1057 = vpack.c.b16 %v727, %v725
  %v1058 = vpack.c.b16 %v730, %v728
  %v1059 = vpack.c.b16 %v731, %v729
  %v1060 = vpack.c.b16 %v734, %v732
  %v1061 = vpack.c.b16 %v735, %v733
  %v1062 = vpack.c.b16 %v738, %v736
  %v1063 = vpack.c.b16 %v739, %v737
  %v1064 = vpack.c.b16 %v742, %v740
  %v1065 = vpack.c.b16 %v743, %v741
  %v1066 = vpack.c.b16 %v746, %v744
  %v1067 = vpack.c.b16 %v747, %v745
  %v1068 = vpack.c.b16 %v750, %v748
  %v1069 = vpack.c.b16 %v751, %v749
  %v1070 = vpack.c.b16 %v754, %v752
  %v1071 = vpack.c.b16 %v755, %v753
  %v1072 = vpack.c.b16 %v758, %v756
  %v1073 = vpack.c.b16 %v759, %v757
  %v1074 = vpack.c.b16 %v762, %v760
  %v1075 = vpack.c.b16 %v763, %v761
  %v1076 = vpack.c.b16 %v766, %v764
  %v1077 = vpack.c.b16 %v767, %v765
  %v1078 = vpack.c.b16 %v770, %v768
  %v1079 = vpack.c.b16 %v771, %v769
  %v1080 = vpack.c.b16 %v774, %v772
  %v1081 = vpack.c.b16 %v775, %v773
  %v1082 = vpack.c.b16 %v778, %v776
  %v1083 = vpack.c.b16 %v779, %v777
  %v1084 = vpack.c.b16 %v782, %v780
  %v1085 = vpack.c.b16 %v783, %v781
  %v1086 = vpack.c.b16 %v786, %v784
  %v1087 = vpack.c.b16 %v787, %v785
  %v1088 = vpack.c.b16 %v790, %v788
  %v1089 = vpack.c.b16 %v791, %v789
  %v1090 = vpack.c.b16 %v794, %v792
  %v1091 = vpack.c.b16 %v795, %v793
  %v1092 = vpack.c.b16 %v798, %v796
  %v1093 = vpack.c.b16 %v799, %v797
  %v1094 = vpack.c.b16 %v802, %v800
  %v1095 = vpack.c.b16 %v803, %v801
  %v1096 = vpack.c.b16 %v806, %v804
  %v1097 = vpack.c.b16 %v807, %v805
  %v1098 = vpack.c.b16 %v810, %v808
  %v1099 = vpack.c.b16 %v811, %v809
  %v1100 = vpack.c.b16 %v814, %v812
  %v1101 = vpack.c.b16 %v815, %v813
  %v1102 = vpack.c.b16 %v818, %v816
  %v1103 = vpack.c.b16 %v819, %v817
  %v1104 = vpack.c.b16 %v822, %v820
  %v1105 = vpack.c.b16 %v823, %v821
  %v1106 = vpack.c.b16 %v826, %v824
  %v1107 = vpack.c.b16 %v827, %v825
  %v1108 = vpack.c.b16 %v830, %v828
  %v1109 = vpack.c.b16 %v831, %v829
  %v1110 = vpack.c.b16 %v834, %v832
  %v1111 = vpack.c.b16 %v835, %v833
  %v1112 = vpack.c.b16 %v838, %v836
  %v1113 = vpack.c.b16 %v839, %v837
  %v1114 = vpack.c.b16 %v842, %v840
  %v1115 = vpack.c.b16 %v843, %v841
  %v1116 = vpack.c.b16 %v846, %v844
  %v1117 = vpack.c.b16 %v847, %v845
  %v1118 = vpack.c.b16 %v850, %v848
  %v1119 = vpack.c.b16 %v851, %v849
  %v1120 = vpack.c.b16 %v854, %v852
  %v1121 = vpack.c.b16 %v855, %v853
  %v1122 = vpack.c.b16 %v858, %v856
  %v1123 = vpack.c.b16 %v859, %v857
  %v1124 = vpack.c.b16 %v862, %v860
  %v1125 = vpack.c.b16 %v863, %v861
  %v1126 = vpack.c.b16 %v866, %v864
  %v1127 = vpack.c.b16 %v867, %v865
  %v1128 = vpack.c.b16 %v870, %v868
  %v1129 = vpack.c.b16 %v871, %v869
  %v1130 = vpack.c.b16 %v874, %v872
  %v1131 = vpack.c.b16 %v875, %v873
  %v1132 = vpack.c.b16 %v878, %v876
  %v1133 = vpack.c.b16 %v879, %v877
  %v1134 = vpack.c.b16 %v882, %v880
  %v1135 = vpack.c.b16 %v883, %v881
  %v1136 = vpack.c.b16 %v886, %v884
  %v1137 = vpack.c.b16 %v887, %v885
  %v1138 = vpack.c.b16 %v890, %v888
  %v1139 = vpack.c.b16 %v891, %v889
  %v1140 = vpack.c.b16 %v894, %v892
  %v1141 = vpack.c.b16 %v895, %v893
  %v1142 = vpack.c.b16 %v898, %v896
  %v1143 = vpack.c.b16 %v899, %v897
  %v1144 = vpack.c.b16 %v902, %v900
  %v1145 = vpack.c.b16 %v903, %v901
  %v1146 = vpack.c.b16 %v906, %v904
  %v1147 = vpack.c.b16 %v907, %v905
  %v1148 = vpack.c.b16 %v910, %v908
  %v1149 = vpack.c.b16 %v911, %v909
  %v1150 = vpack.c.b16 %v914, %v912
  %v1151 = vpack.c.b16 %v915, %v913
  %v1152 = vpack.c.b16 %v918, %v916
  %v1153 = vpack.c.b16 %v919, %v917
  %v1154 = vpack.c.b16 %v922, %v920
  %v1155 = vpack.c.b16 %v923, %v921
  %v1156 = vpack.c.b16 %v926, %v924
  %v1157 = vpack.c.b16 %v927, %v925
  %v1158 = vpack.c.b16 %v930, %v928
  %v1159 = vpack.c.b16 %v931, %v929
  %v1160 = vpack.c.b16 %v934, %v932
  %v1161 = vpack.c.b16 %v935, %v933
  %v1162 = vpack.c.b16 %v938, %v936
  %v1163 = vpack.c.b16 %v939, %v937
  %v1164 = vpack.c.b16 %v942, %v940
  %v1165 = vpack.c.b16 %v943, %v941
  %v1166 = vpack.c.b16 %v946, %v944
  %v1167 = vpack.c.b16 %v947, %v945
  %v1168 = vpack.c.b16 %v950, %v948
  %v1169 = vpack.c.b16 %v951, %v949
  %v1170 = vpack.c.b16 %v954, %v952
  %v1171 = vpack.c.b16 %v955, %v953
  %v1172 = vpack.c.b16 %v958, %v956
  %v1173 = vpack.c.b16 %v959, %v957
  %v1174 = vpack.c.b16 %v962, %v960
  %v1175 = vpack.c.b16 %v963, %v961
  %v1176 = vpack.c.b16 %v966, %v964
  %v1177 = vpack.c.b16 %v967, %v965
  %v1178 = vpack.c.b16 %v970, %v968
  %v1179 = vpack.c.b16 %v971, %v969
  %v1180 = vpack.c.b16 %v974, %v972
  %v1181 = vpack.c.b16 %v975, %v973
  %v1182 = vpack.c.b16 %v978, %v976
  %v1183 = vpack.c.b16 %v979, %v977
  %v1184 = vpack.c.b16 %v982, %v980
  %v1185 = vpack.c.b16 %v983, %v981
  %v1186 = vpack.c.b16 %v986, %v984
  %v1187 = vpack.c.b16 %v987, %v985
  %v1188 = vpack.c.b16 %v990, %v988
  %v1189 = vpack.c.b16 %v991, %v989
  %v1190 = vpack.c.b16 %v994, %v992
  %v1191 = vpack.c.b16 %v995, %v993
  %v1192 = vpack.c.b16 %v998, %v996
  %v1193 = vpack.c.b16 %v999, %v997
  %v1194 = vpack.c.b16 %v1002, %v1000
  %v1195 = vpack.c.b16 %v1003, %v1001
  %v1196 = vpack.c.b16 %v1006, %v1004
  %v1197 = vpack.c.b16 %v1007, %v1005
  %v1198 = vpack.c.b16 %v1010, %v1008
  %v1199 = vpack.c.b16 %v1011, %v1009
  %v1200 = vpack.c.b16 %v1014, %v1012
  %v1201 = vpack.c.b16 %v1015, %v1013
  %v1202 = vpack.c.b16 %v1018, %v1016
  %v1203 = vpack.c.b16 %v1019, %v1017
  %v1204 = vpack.c.b16 %v1022, %v1020
  %v1205 = vpack.c.b16 %v1023, %v1021
  %v1206 = vpack.c.b16 %v1026, %v1024
  %v1207 = vpack.c.b16 %v1027, %v1025
  %v1208 = vpack.c.b16 %v1030, %v1028
  %v1209 = vpack.c.b16 %v1031, %v1029
  %v1210 = vpack.c.b16 %v1034, %v1032
  %v1211 = vpack.c.b16 %v1035, %v1033
  %1388 = vmatprep.subr.bf16.mxu0 %v1037
  %1389 = vmatpush1.bf16.msra.mxu0 %v1036
  %1390 = vmatprep.subr.bf16.mxu0 %v1039
  %1391 = vmatpush1.bf16.msra.mxu0 %v1038
  %1392 = vmatprep.subr.bf16.mxu0 %v1041
  %1393 = vmatpush1.bf16.msra.mxu0 %v1040
  %1394 = vmatprep.subr.bf16.mxu0 %v1043
  %1395 = vmatpush1.bf16.msra.mxu0 %v1042
  %1396 = vmatprep.subr.bf16.mxu0 %v1045
  %1397 = vmatpush1.bf16.msra.mxu0 %v1044
  %1398 = vmatprep.subr.bf16.mxu0 %v1047
  %1399 = vmatpush1.bf16.msra.mxu0 %v1046
  %1400 = vmatprep.subr.bf16.mxu0 %v1049
  %1401 = vmatpush1.bf16.msra.mxu0 %v1048
  %1402 = vmatprep.subr.bf16.mxu0 %v1051
  %1403 = vmatpush1.bf16.msra.mxu0 %v1050
  %1404 = vmatprep.subr.bf16.mxu0 %v1053
  %1405 = vmatpush1.bf16.msra.mxu0 %v1052
  %1406 = vmatprep.subr.bf16.mxu0 %v1055
  %1407 = vmatpush1.bf16.msra.mxu0 %v1054
  %1408 = vmatprep.subr.bf16.mxu0 %v1057
  %1409 = vmatpush1.bf16.msra.mxu0 %v1056
  %1410 = vmatprep.subr.bf16.mxu0 %v1059
  %1411 = vmatpush1.bf16.msra.mxu0 %v1058
  %1412 = vmatprep.subr.bf16.mxu0 %v1061
  %1413 = vmatpush1.bf16.msra.mxu0 %v1060
  %1414 = vmatprep.subr.bf16.mxu0 %v1063
  %1415 = vmatpush1.bf16.msra.mxu0 %v1062
  %1416 = vmatprep.subr.bf16.mxu0 %v1065
  %1417 = vmatpush1.bf16.msra.mxu0 %v1064
  %1418 = vmatprep.subr.bf16.mxu0 %v1067
  %1419 = vmatpush1.bf16.msra.mxu0 %v1066
  %1420 = vmatprep.mubr.bf16.mxu0 %v399
  %1421 = vmatmul.mubr.bf16.gmra.mrb[0].mxu0 %v398
  %v1422 = vpop.f32.mrb[0].mxu0
  %v1423 = vadd.f32 0.0, %v1422
  %v1424 = vpop.f32.mrb[0].mxu0
  %v1425 = vadd.f32 0.0, %v1424
  %v1426 = vpop.f32.mrb[0].mxu0
  %v1427 = vadd.f32 0.0, %v1426
  %v1428 = vpop.f32.mrb[0].mxu0
  %v1429 = vadd.f32 0.0, %v1428
  %1430 = vmatprep.mubr.bf16.mxu0 %v410
  %1431 = vmatmul.mubr.bf16.gmra.mrb[0].mxu0 %v409
  %v1432 = vpop.f32.mrb[0].mxu0
  %v1433 = vadd.f32 0.0, %v1432
  %v1434 = vpop.f32.mrb[0].mxu0
  %v1435 = vadd.f32 0.0, %v1434
  %v1436 = vpop.f32.mrb[0].mxu0
  %v1437 = vadd.f32 0.0, %v1436
  %v1438 = vpop.f32.mrb[0].mxu0
  %v1439 = vadd.f32 0.0, %v1438
  %1440 = vmatprep.mubr.bf16.mxu0 %v421
  %1441 = vmatmul.mubr.bf16.gmra.mrb[0].mxu0 %v420
  %v1442 = vpop.f32.mrb[0].mxu0
  %v1443 = vadd.f32 0.0, %v1442
  %v1444 = vpop.f32.mrb[0].mxu0
  %v1445 = vadd.f32 0.0, %v1444
  %v1446 = vpop.f32.mrb[0].mxu0
  %v1447 = vadd.f32 0.0, %v1446
  %v1448 = vpop.f32.mrb[0].mxu0
  %v1449 = vadd.f32 0.0, %v1448
  %1450 = vmatprep.mubr.bf16.mxu0 %v432
  %1451 = vmatmul.mubr.bf16.gmra.mrb[0].mxu0 %v431
  %v1452 = vpop.f32.mrb[0].mxu0
  %v1453 = vadd.f32 0.0, %v1452
  %v1454 = vpop.f32.mrb[0].mxu0
  %v1455 = vadd.f32 0.0, %v1454
  %v1456 = vpop.f32.mrb[0].mxu0
  %v1457 = vadd.f32 0.0, %v1456
  %v1458 = vpop.f32.mrb[0].mxu0
  %v1459 = vadd.f32 0.0, %v1458
  %1460 = vmatprep.mubr.bf16.mxu0 %v443
  %1461 = vmatmul.mubr.bf16.gmra.mrb[0].mxu0 %v442
  %v1462 = vpop.f32.mrb[0].mxu0
  %v1463 = vadd.f32 0.0, %v1462
  %v1464 = vpop.f32.mrb[0].mxu0
  %v1465 = vadd.f32 0.0, %v1464
  %v1466 = vpop.f32.mrb[0].mxu0
  %v1467 = vpop.f32.mrb[0].mxu0
  %1468 = vdwg.mxu0
  %1469 = vmatprep.subr.bf16.mxu0 %v1069
  %1470 = vmatpush1.bf16.msra.mxu0 %v1068
  %1471 = vmatprep.subr.bf16.mxu0 %v1071
  %1472 = vmatpush1.bf16.msra.mxu0 %v1070
  %1473 = vmatprep.subr.bf16.mxu0 %v1073
  %1474 = vmatpush1.bf16.msra.mxu0 %v1072
  %1475 = vmatprep.subr.bf16.mxu0 %v1075
  %1476 = vmatpush1.bf16.msra.mxu0 %v1074
  %1477 = vmatprep.subr.bf16.mxu0 %v1077
  %1478 = vmatpush1.bf16.msra.mxu0 %v1076
  %1479 = vmatprep.subr.bf16.mxu0 %v1079
  %1480 = vmatpush1.bf16.msra.mxu0 %v1078
  %1481 = vmatprep.subr.bf16.mxu0 %v1081
  %1482 = vmatpush1.bf16.msra.mxu0 %v1080
  %1483 = vmatprep.subr.bf16.mxu0 %v1083
  %1484 = vmatpush1.bf16.msra.mxu0 %v1082
  %1485 = vmatprep.subr.bf16.mxu0 %v1085
  %1486 = vmatpush1.bf16.msra.mxu0 %v1084
  %1487 = vmatprep.subr.bf16.mxu0 %v1087
  %1488 = vmatpush1.bf16.msra.mxu0 %v1086
  %1489 = vmatprep.subr.bf16.mxu0 %v1089
  %1490 = vmatpush1.bf16.msra.mxu0 %v1088
  %1491 = vmatprep.subr.bf16.mxu0 %v1091
  %1492 = vmatpush1.bf16.msra.mxu0 %v1090
  %1493 = vmatprep.subr.bf16.mxu0 %v1093
  %1494 = vmatpush1.bf16.msra.mxu0 %v1092
  %1495 = vmatprep.subr.bf16.mxu0 %v1095
  %1496 = vmatpush1.bf16.msra.mxu0 %v1094
  %1497 = vmatprep.subr.bf16.mxu0 %v1097
  %1498 = vmatpush1.bf16.msra.mxu0 %v1096
  %1499 = vmatprep.subr.bf16.mxu0 %v1099
  %1500 = vmatpush1.bf16.msra.mxu0 %v1098
  %1501 = vmatprep.mubr.bf16.mxu0 %v401
  %1502 = vmatmul.mubr.bf16.gmra.mrb[0].mxu0 %v400
  %v1503 = vpop.f32.mrb[0].mxu0
  %v1504 = vadd.f32 %v1423, %v1503
  %v1505 = vpop.f32.mrb[0].mxu0
  %v1506 = vadd.f32 %v1425, %v1505
  %v1507 = vpop.f32.mrb[0].mxu0
  %v1508 = vadd.f32 %v1427, %v1507
  %v1509 = vpop.f32.mrb[0].mxu0
  %v1510 = vadd.f32 %v1429, %v1509
  %1511 = vmatprep.mubr.bf16.mxu0 %v412
  %1512 = vmatmul.mubr.bf16.gmra.mrb[0].mxu0 %v411
  %v1513 = vpop.f32.mrb[0].mxu0
  %v1514 = vadd.f32 %v1433, %v1513
  %v1515 = vpop.f32.mrb[0].mxu0
  %v1516 = vadd.f32 %v1435, %v1515
  %v1517 = vpop.f32.mrb[0].mxu0
  %v1518 = vadd.f32 %v1437, %v1517
  %v1519 = vpop.f32.mrb[0].mxu0
  %v1520 = vadd.f32 %v1439, %v1519
  %1521 = vmatprep.mubr.bf16.mxu0 %v423
  %1522 = vmatmul.mubr.bf16.gmra.mrb[0].mxu0 %v422
  %v1523 = vpop.f32.mrb[0].mxu0
  %v1524 = vadd.f32 %v1443, %v1523
  %v1525 = vpop.f32.mrb[0].mxu0
  %v1526 = vadd.f32 %v1445, %v1525
  %v1527 = vpop.f32.mrb[0].mxu0
  %v1528 = vadd.f32 %v1447, %v1527
  %v1529 = vpop.f32.mrb[0].mxu0
  %v1530 = vadd.f32 %v1449, %v1529
  %1531 = vmatprep.mubr.bf16.mxu0 %v434
  %1532 = vmatmul.mubr.bf16.gmra.mrb[0].mxu0 %v433
  %v1533 = vpop.f32.mrb[0].mxu0
  %v1534 = vadd.f32 %v1453, %v1533
  %v1535 = vpop.f32.mrb[0].mxu0
  %v1536 = vadd.f32 %v1455, %v1535
  %v1537 = vpop.f32.mrb[0].mxu0
  %v1538 = vadd.f32 %v1457, %v1537
  %v1539 = vpop.f32.mrb[0].mxu0
  %v1540 = vadd.f32 %v1459, %v1539
  %1541 = vmatprep.mubr.bf16.mxu0 %v445
  %1542 = vmatmul.mubr.bf16.gmra.mrb[0].mxu0 %v444
  %v1543 = vpop.f32.mrb[0].mxu0
  %v1544 = vadd.f32 %v1463, %v1543
  %v1545 = vpop.f32.mrb[0].mxu0
  %v1546 = vadd.f32 %v1465, %v1545
  %v1547 = vpop.f32.mrb[0].mxu0
  %v1548 = vpop.f32.mrb[0].mxu0
  %1549 = vdwg.mxu0
  %1550 = vmatprep.subr.bf16.mxu0 %v1101
  %1551 = vmatpush1.bf16.msra.mxu0 %v1100
  %1552 = vmatprep.subr.bf16.mxu0 %v1103
  %1553 = vmatpush1.bf16.msra.mxu0 %v1102
  %1554 = vmatprep.subr.bf16.mxu0 %v1105
  %1555 = vmatpush1.bf16.msra.mxu0 %v1104
  %1556 = vmatprep.subr.bf16.mxu0 %v1107
  %1557 = vmatpush1.bf16.msra.mxu0 %v1106
  %1558 = vmatprep.subr.bf16.mxu0 %v1109
  %1559 = vmatpush1.bf16.msra.mxu0 %v1108
  %1560 = vmatprep.subr.bf16.mxu0 %v1111
  %1561 = vmatpush1.bf16.msra.mxu0 %v1110
  %1562 = vmatprep.subr.bf16.mxu0 %v1113
  %1563 = vmatpush1.bf16.msra.mxu0 %v1112
  %1564 = vmatprep.subr.bf16.mxu0 %v1115
  %1565 = vmatpush1.bf16.msra.mxu0 %v1114
  %1566 = vmatprep.subr.bf16.mxu0 %v1117
  %1567 = vmatpush1.bf16.msra.mxu0 %v1116
  %1568 = vmatprep.subr.bf16.mxu0 %v1119
  %1569 = vmatpush1.bf16.msra.mxu0 %v1118
  %1570 = vmatprep.subr.bf16.mxu0 %v1121
  %1571 = vmatpush1.bf16.msra.mxu0 %v1120
  %1572 = vmatprep.subr.bf16.mxu0 %v1123
  %1573 = vmatpush1.bf16.msra.mxu0 %v1122
  %1574 = vmatprep.subr.bf16.mxu0 %v1125
  %1575 = vmatpush1.bf16.msra.mxu0 %v1124
  %1576 = vmatprep.subr.bf16.mxu0 %v1127
  %1577 = vmatpush1.bf16.msra.mxu0 %v1126
  %1578 = vmatprep.subr.bf16.mxu0 %v1129
  %1579 = vmatpush1.bf16.msra.mxu0 %v1128
  %1580 = vmatprep.subr.bf16.mxu0 %v1131
  %1581 = vmatpush1.bf16.msra.mxu0 %v1130
  %1582 = vmatprep.mubr.bf16.mxu0 %v403
  %1583 = vmatmul.mubr.bf16.gmra.mrb[0].mxu0 %v402
  %v1584 = vpop.f32.mrb[0].mxu0
  %v1585 = vadd.f32 %v1504, %v1584
  %v1586 = vpop.f32.mrb[0].mxu0
  %v1587 = vadd.f32 %v1506, %v1586
  %v1588 = vpop.f32.mrb[0].mxu0
  %v1589 = vadd.f32 %v1508, %v1588
  %v1590 = vpop.f32.mrb[0].mxu0
  %v1591 = vadd.f32 %v1510, %v1590
  %1592 = vmatprep.mubr.bf16.mxu0 %v414
  %1593 = vmatmul.mubr.bf16.gmra.mrb[0].mxu0 %v413
  %v1594 = vpop.f32.mrb[0].mxu0
  %v1595 = vadd.f32 %v1514, %v1594
  %v1596 = vpop.f32.mrb[0].mxu0
  %v1597 = vadd.f32 %v1516, %v1596
  %v1598 = vpop.f32.mrb[0].mxu0
  %v1599 = vadd.f32 %v1518, %v1598
  %v1600 = vpop.f32.mrb[0].mxu0
  %v1601 = vadd.f32 %v1520, %v1600
  %1602 = vmatprep.mubr.bf16.mxu0 %v425
  %1603 = vmatmul.mubr.bf16.gmra.mrb[0].mxu0 %v424
  %v1604 = vpop.f32.mrb[0].mxu0
  %v1605 = vadd.f32 %v1524, %v1604
  %v1606 = vpop.f32.mrb[0].mxu0
  %v1607 = vadd.f32 %v1526, %v1606
  %v1608 = vpop.f32.mrb[0].mxu0
  %v1609 = vadd.f32 %v1528, %v1608
  %v1610 = vpop.f32.mrb[0].mxu0
  %v1611 = vadd.f32 %v1530, %v1610
  %1612 = vmatprep.mubr.bf16.mxu0 %v436
  %1613 = vmatmul.mubr.bf16.gmra.mrb[0].mxu0 %v435
  %v1614 = vpop.f32.mrb[0].mxu0
  %v1615 = vadd.f32 %v1534, %v1614
  %v1616 = vpop.f32.mrb[0].mxu0
  %v1617 = vadd.f32 %v1536, %v1616
  %v1618 = vpop.f32.mrb[0].mxu0
  %v1619 = vadd.f32 %v1538, %v1618
  %v1620 = vpop.f32.mrb[0].mxu0
  %v1621 = vadd.f32 %v1540, %v1620
  %1622 = vmatprep.mubr.bf16.mxu0 %v447
  %1623 = vmatmul.mubr.bf16.gmra.mrb[0].mxu0 %v446
  %v1624 = vpop.f32.mrb[0].mxu0
  %v1625 = vadd.f32 %v1544, %v1624
  %v1626 = vpop.f32.mrb[0].mxu0
  %v1627 = vadd.f32 %v1546, %v1626
  %v1628 = vpop.f32.mrb[0].mxu0
  %v1629 = vpop.f32.mrb[0].mxu0
  %1630 = vdwg.mxu0
  %1631 = vmatprep.subr.bf16.mxu0 %v1133
  %1632 = vmatpush1.bf16.msra.mxu0 %v1132
  %1633 = vmatprep.subr.bf16.mxu0 %v1135
  %1634 = vmatpush1.bf16.msra.mxu0 %v1134
  %1635 = vmatprep.subr.bf16.mxu0 %v1137
  %1636 = vmatpush1.bf16.msra.mxu0 %v1136
  %1637 = vmatprep.subr.bf16.mxu0 %v1139
  %1638 = vmatpush1.bf16.msra.mxu0 %v1138
  %1639 = vmatprep.subr.bf16.mxu0 %v1141
  %1640 = vmatpush1.bf16.msra.mxu0 %v1140
  %1641 = vmatprep.subr.bf16.mxu0 %v1143
  %1642 = vmatpush1.bf16.msra.mxu0 %v1142
  %1643 = vmatprep.subr.bf16.mxu0 %v1145
  %1644 = vmatpush1.bf16.msra.mxu0 %v1144
  %1645 = vmatprep.subr.bf16.mxu0 %v1147
  %1646 = vmatpush1.bf16.msra.mxu0 %v1146
  %1647 = vmatprep.subr.bf16.mxu0 %v1149
  %1648 = vmatpush1.bf16.msra.mxu0 %v1148
  %1649 = vmatprep.subr.bf16.mxu0 %v1151
  %1650 = vmatpush1.bf16.msra.mxu0 %v1150
  %1651 = vmatprep.subr.bf16.mxu0 %v1153
  %1652 = vmatpush1.bf16.msra.mxu0 %v1152
  %1653 = vmatprep.subr.bf16.mxu0 %v1155
  %1654 = vmatpush1.bf16.msra.mxu0 %v1154
  %1655 = vmatprep.subr.bf16.mxu0 %v1157
  %1656 = vmatpush1.bf16.msra.mxu0 %v1156
  %1657 = vmatprep.subr.bf16.mxu0 %v1159
  %1658 = vmatpush1.bf16.msra.mxu0 %v1158
  %1659 = vmatprep.subr.bf16.mxu0 %v1161
  %1660 = vmatpush1.bf16.msra.mxu0 %v1160
  %1661 = vmatprep.subr.bf16.mxu0 %v1163
  %1662 = vmatpush1.bf16.msra.mxu0 %v1162
  %1663 = vmatprep.mubr.bf16.mxu0 %v405
  %1664 = vmatmul.mubr.bf16.gmra.mrb[0].mxu0 %v404
  %v1665 = vpop.f32.mrb[0].mxu0
  %v1666 = vadd.f32 %v1585, %v1665
  %v1667 = vpop.f32.mrb[0].mxu0
  %v1668 = vadd.f32 %v1587, %v1667
  %v1669 = vpop.f32.mrb[0].mxu0
  %v1670 = vadd.f32 %v1589, %v1669
  %v1671 = vpop.f32.mrb[0].mxu0
  %v1672 = vadd.f32 %v1591, %v1671
  %1673 = vmatprep.mubr.bf16.mxu0 %v416
  %1674 = vmatmul.mubr.bf16.gmra.mrb[0].mxu0 %v415
  %v1675 = vpop.f32.mrb[0].mxu0
  %v1676 = vadd.f32 %v1595, %v1675
  %v1677 = vpop.f32.mrb[0].mxu0
  %v1678 = vadd.f32 %v1597, %v1677
  %v1679 = vpop.f32.mrb[0].mxu0
  %v1680 = vadd.f32 %v1599, %v1679
  %v1681 = vpop.f32.mrb[0].mxu0
  %v1682 = vadd.f32 %v1601, %v1681
  %1683 = vmatprep.mubr.bf16.mxu0 %v427
  %1684 = vmatmul.mubr.bf16.gmra.mrb[0].mxu0 %v426
  %v1685 = vpop.f32.mrb[0].mxu0
  %v1686 = vadd.f32 %v1605, %v1685
  %v1687 = vpop.f32.mrb[0].mxu0
  %v1688 = vadd.f32 %v1607, %v1687
  %v1689 = vpop.f32.mrb[0].mxu0
  %v1690 = vadd.f32 %v1609, %v1689
  %v1691 = vpop.f32.mrb[0].mxu0
  %v1692 = vadd.f32 %v1611, %v1691
  %1693 = vmatprep.mubr.bf16.mxu0 %v438
  %1694 = vmatmul.mubr.bf16.gmra.mrb[0].mxu0 %v437
  %v1695 = vpop.f32.mrb[0].mxu0
  %v1696 = vadd.f32 %v1615, %v1695
  %v1697 = vpop.f32.mrb[0].mxu0
  %v1698 = vadd.f32 %v1617, %v1697
  %v1699 = vpop.f32.mrb[0].mxu0
  %v1700 = vadd.f32 %v1619, %v1699
  %v1701 = vpop.f32.mrb[0].mxu0
  %v1702 = vadd.f32 %v1621, %v1701
  %1703 = vmatprep.mubr.bf16.mxu0 %v449
  %1704 = vmatmul.mubr.bf16.gmra.mrb[0].mxu0 %v448
  %v1705 = vpop.f32.mrb[0].mxu0
  %v1706 = vadd.f32 %v1625, %v1705
  %v1707 = vpop.f32.mrb[0].mxu0
  %v1708 = vadd.f32 %v1627, %v1707
  %v1709 = vpop.f32.mrb[0].mxu0
  %v1710 = vpop.f32.mrb[0].mxu0
  %1711 = vdwg.mxu0
  %1712 = vmatprep.subr.bf16.mxu0 %v1165
  %1713 = vmatpush1.bf16.msra.mxu0 %v1164
  %1714 = vmatprep.subr.bf16.mxu0 %v1167
  %1715 = vmatpush1.bf16.msra.mxu0 %v1166
  %1716 = vmatprep.subr.bf16.mxu0 %v1169
  %1717 = vmatpush1.bf16.msra.mxu0 %v1168
  %1718 = vmatprep.subr.bf16.mxu0 %v1171
  %1719 = vmatpush1.bf16.msra.mxu0 %v1170
  %1720 = vmatprep.subr.bf16.mxu0 %v1173
  %1721 = vmatpush1.bf16.msra.mxu0 %v1172
  %1722 = vmatprep.subr.bf16.mxu0 %v1175
  %1723 = vmatpush1.bf16.msra.mxu0 %v1174
  %1724 = vmatprep.subr.bf16.mxu0 %v1177
  %1725 = vmatpush1.bf16.msra.mxu0 %v1176
  %1726 = vmatprep.subr.bf16.mxu0 %v1179
  %1727 = vmatpush1.bf16.msra.mxu0 %v1178
  %1728 = vmatprep.subr.bf16.mxu0 %v1181
  %1729 = vmatpush1.bf16.msra.mxu0 %v1180
  %1730 = vmatprep.subr.bf16.mxu0 %v1183
  %1731 = vmatpush1.bf16.msra.mxu0 %v1182
  %1732 = vmatprep.subr.bf16.mxu0 %v1185
  %1733 = vmatpush1.bf16.msra.mxu0 %v1184
  %1734 = vmatprep.subr.bf16.mxu0 %v1187
  %1735 = vmatpush1.bf16.msra.mxu0 %v1186
  %1736 = vmatprep.subr.bf16.mxu0 %v1189
  %1737 = vmatpush1.bf16.msra.mxu0 %v1188
  %1738 = vmatprep.subr.bf16.mxu0 %v1191
  %1739 = vmatpush1.bf16.msra.mxu0 %v1190
  %1740 = vmatprep.subr.bf16.mxu0 %v1193
  %1741 = vmatpush1.bf16.msra.mxu0 %v1192
  %1742 = vmatprep.subr.bf16.mxu0 %v1195
  %1743 = vmatpush1.bf16.msra.mxu0 %v1194
  %1744 = vmatprep.mubr.bf16.mxu0 %v407
  %1745 = vmatmul.mubr.bf16.gmra.mrb[0].mxu0 %v406
  %v1746 = vpop.f32.mrb[0].mxu0
  %v1747 = vadd.f32 %v1666, %v1746
  %v1748 = vpop.f32.mrb[0].mxu0
  %v1749 = vadd.f32 %v1668, %v1748
  %v1750 = vpop.f32.mrb[0].mxu0
  %v1751 = vadd.f32 %v1670, %v1750
  %v1752 = vpop.f32.mrb[0].mxu0
  %v1753 = vadd.f32 %v1672, %v1752
  %1754 = vmatprep.mubr.bf16.mxu0 %v418
  %1755 = vmatmul.mubr.bf16.gmra.mrb[0].mxu0 %v417
  %v1756 = vpop.f32.mrb[0].mxu0
  %v1757 = vadd.f32 %v1676, %v1756
  %v1758 = vpop.f32.mrb[0].mxu0
  %v1759 = vadd.f32 %v1678, %v1758
  %v1760 = vpop.f32.mrb[0].mxu0
  %v1761 = vadd.f32 %v1680, %v1760
  %v1762 = vpop.f32.mrb[0].mxu0
  %v1763 = vadd.f32 %v1682, %v1762
  %1764 = vmatprep.mubr.bf16.mxu0 %v429
  %1765 = vmatmul.mubr.bf16.gmra.mrb[0].mxu0 %v428
  %v1766 = vpop.f32.mrb[0].mxu0
  %v1767 = vadd.f32 %v1686, %v1766
  %v1768 = vpop.f32.mrb[0].mxu0
  %v1769 = vadd.f32 %v1688, %v1768
  %v1770 = vpop.f32.mrb[0].mxu0
  %v1771 = vadd.f32 %v1690, %v1770
  %v1772 = vpop.f32.mrb[0].mxu0
  %v1773 = vadd.f32 %v1692, %v1772
  %1774 = vmatprep.mubr.bf16.mxu0 %v440
  %1775 = vmatmul.mubr.bf16.gmra.mrb[0].mxu0 %v439
  %v1776 = vpop.f32.mrb[0].mxu0
  %v1777 = vadd.f32 %v1696, %v1776
  %v1778 = vpop.f32.mrb[0].mxu0
  %v1779 = vadd.f32 %v1698, %v1778
  %v1780 = vpop.f32.mrb[0].mxu0
  %v1781 = vadd.f32 %v1700, %v1780
  %v1782 = vpop.f32.mrb[0].mxu0
  %v1783 = vadd.f32 %v1702, %v1782
  %1784 = vmatprep.mubr.bf16.mxu0 %v451
  %1785 = vmatmul.mubr.bf16.gmra.mrb[0].mxu0 %v450
  %v1786 = vpop.f32.mrb[0].mxu0
  %v1787 = vadd.f32 %v1706, %v1786
  %v1788 = vpop.f32.mrb[0].mxu0
  %v1789 = vadd.f32 %v1708, %v1788
  %v1790 = vpop.f32.mrb[0].mxu0
  %v1791 = vpop.f32.mrb[0].mxu0
  %1792 = vdwg.mxu0
  %1793 = vmatprep.subr.bf16.mxu0 %v1197
  %1794 = vmatpush1.bf16.msra.mxu0 %v1196
  %1795 = vmatprep.subr.bf16.mxu0 %v1199
  %1796 = vmatpush1.bf16.msra.mxu0 %v1198
  %1797 = vmatprep.subr.bf16.mxu0 %v1201
  %1798 = vmatpush1.bf16.msra.mxu0 %v1200
  %1799 = vmatprep.subr.bf16.mxu0 %v1203
  %1800 = vmatpush1.bf16.msra.mxu0 %v1202
  %1801 = vmatprep.subr.bf16.mxu0 %v1205
  %1802 = vmatpush1.bf16.msra.mxu0 %v1204
  %1803 = vmatprep.subr.bf16.mxu0 %v1207
  %1804 = vmatpush1.bf16.msra.mxu0 %v1206
  %1805 = vmatprep.subr.bf16.mxu0 %v1209
  %1806 = vmatpush1.bf16.msra.mxu0 %v1208
  %1807 = vmatprep.subr.bf16.mxu0 %v1211
  %1808 = vmatpush1.bf16.msra.mxu0 %v1210
  %1809 = vmatprep.subr.bf16.mxu0 0
  %1810 = vmatpush1.bf16.msra.mxu0 0
  %1811 = vmatprep.subr.bf16.mxu0 0
  %1812 = vmatpush1.bf16.msra.mxu0 0
  %1813 = vmatprep.subr.bf16.mxu0 0
  %1814 = vmatpush1.bf16.msra.mxu0 0
  %1815 = vmatprep.subr.bf16.mxu0 0
  %1816 = vmatpush1.bf16.msra.mxu0 0
  %1817 = vmatprep.subr.bf16.mxu0 0
  %1818 = vmatpush1.bf16.msra.mxu0 0
  %1819 = vmatprep.subr.bf16.mxu0 0
  %1820 = vmatpush1.bf16.msra.mxu0 0
  %1821 = vmatprep.subr.bf16.mxu0 0
  %1822 = vmatpush1.bf16.msra.mxu0 0
  %1823 = vmatprep.subr.bf16.mxu0 0
  %1824 = vmatpush1.bf16.msra.mxu0 0
  %1825 = vmatprep.mubr.bf16.mxu0 0
  %1826 = vmatmul.mubr.bf16.gmra.mrb[0].mxu0 %v408
  %v1827 = vpop.f32.mrb[0].mxu0
  %v1828 = vadd.f32 %v1747, %v1827
  %v1829 = vpop.f32.mrb[0].mxu0
  %v1830 = vadd.f32 %v1749, %v1829
  %v1831 = vpop.f32.mrb[0].mxu0
  %v1832 = vadd.f32 %v1751, %v1831
  %v1833 = vpop.f32.mrb[0].mxu0
  %v1834 = vadd.f32 %v1753, %v1833
  %1835 = vmatprep.mubr.bf16.mxu0 0
  %1836 = vmatmul.mubr.bf16.gmra.mrb[0].mxu0 %v419
  %v1837 = vpop.f32.mrb[0].mxu0
  %v1838 = vadd.f32 %v1757, %v1837
  %v1839 = vpop.f32.mrb[0].mxu0
  %v1840 = vadd.f32 %v1759, %v1839
  %v1841 = vpop.f32.mrb[0].mxu0
  %v1842 = vadd.f32 %v1761, %v1841
  %v1843 = vpop.f32.mrb[0].mxu0
  %v1844 = vadd.f32 %v1763, %v1843
  %1845 = vmatprep.mubr.bf16.mxu0 0
  %1846 = vmatmul.mubr.bf16.gmra.mrb[0].mxu0 %v430
  %v1847 = vpop.f32.mrb[0].mxu0
  %v1848 = vadd.f32 %v1767, %v1847
  %v1849 = vpop.f32.mrb[0].mxu0
  %v1850 = vadd.f32 %v1769, %v1849
  %v1851 = vpop.f32.mrb[0].mxu0
  %v1852 = vadd.f32 %v1771, %v1851
  %v1853 = vpop.f32.mrb[0].mxu0
  %v1854 = vadd.f32 %v1773, %v1853
  %1855 = vmatprep.mubr.bf16.mxu0 0
  %1856 = vmatmul.mubr.bf16.gmra.mrb[0].mxu0 %v441
  %v1857 = vpop.f32.mrb[0].mxu0
  %v1858 = vadd.f32 %v1777, %v1857
  %v1859 = vpop.f32.mrb[0].mxu0
  %v1860 = vadd.f32 %v1779, %v1859
  %v1861 = vpop.f32.mrb[0].mxu0
  %v1862 = vadd.f32 %v1781, %v1861
  %v1863 = vpop.f32.mrb[0].mxu0
  %v1864 = vadd.f32 %v1783, %v1863
  %1865 = vmatprep.mubr.bf16.mxu0 0
  %1866 = vmatmul.mubr.bf16.gmra.mrb[0].mxu0 %v452
  %v1867 = vpop.f32.mrb[0].mxu0
  %v1868 = vadd.f32 %v1787, %v1867
  %v1869 = vpop.f32.mrb[0].mxu0
  %v1870 = vadd.f32 %v1789, %v1869
  %v1871 = vpop.f32.mrb[0].mxu0
  %v1872 = vpop.f32.mrb[0].mxu0
  %1873 = vdwg.mxu0
  %v1874 = vmul.f32 %v1828, %v1828
  %v1875 = vmul.f32 %v1832, %v1832
  %v1876 = vmul.f32 %v1838, %v1838
  %v1877 = vmul.f32 %v1842, %v1842
  %v1878 = vmul.f32 %v1848, %v1848
  %v1879 = vmul.f32 %v1852, %v1852
  %v1880 = vmul.f32 %v1858, %v1858
  %v1881 = vmul.f32 %v1862, %v1862
  %v1882 = vmul.f32 %v1868, %v1868
  %v1883 = vpack.c.bf16 %v1875, %v1874
  %v1884 = vpack.c.bf16 %v1877, %v1876
  %v1885 = vpack.c.bf16 %v1879, %v1878
  %v1886 = vpack.c.bf16 %v1881, %v1880
  %v1887 = vpack.c.bf16 %v1882, %v1882
  %v1888 = vmul.f32 %v1830, %v1830
  %v1889 = vmul.f32 %v1834, %v1834
  %v1890 = vmul.f32 %v1840, %v1840
  %v1891 = vmul.f32 %v1844, %v1844
  %v1892 = vmul.f32 %v1850, %v1850
  %v1893 = vmul.f32 %v1854, %v1854
  %v1894 = vmul.f32 %v1860, %v1860
  %v1895 = vmul.f32 %v1864, %v1864
  %v1896 = vmul.f32 %v1870, %v1870
  %v1897 = vpack.c.bf16 %v1889, %v1888
  %v1898 = vpack.c.bf16 %v1891, %v1890
  %v1899 = vpack.c.bf16 %v1893, %v1892
  %v1900 = vpack.c.bf16 %v1895, %v1894
  %v1901 = vpack.c.bf16 %v1896, %v1896
  %v1902 = vld [vmem:[%s2] sm:$0xf]
  %v1903 = vld [vmem:[%s2 + $0x4] sm:$0xf]
  %v1904 = vld [vmem:[%s2 + $0x8] sm:$0xf]
  %v1905 = vld [vmem:[%s2 + $0xc] sm:$0xf]
  %v1906 = vld [vmem:[%s2 + $0x10] sm:$0xf]
  %v1907 = vld [vmem:[%s2 + $0x14] sm:$0xf]
  %v1908 = vld [vmem:[%s2 + $0x18] sm:$0xf]
  %v1909 = vld [vmem:[%s2 + $0x1c] sm:$0xf]
  %v1910 = vld [vmem:[%s2 + $0x20] sm:$0xf]
  %s1911 = scalar_lea.vmem %s2, 36
  %v1912 = vld [vmem:[%s1911] sm:$0xf]
  %v1913 = vld [vmem:[%s1911 + $0x4] sm:$0xf]
  %v1914 = vld [vmem:[%s1911 + $0x8] sm:$0xf]
  %v1915 = vld [vmem:[%s1911 + $0xc] sm:$0xf]
  %v1916 = vld [vmem:[%s1911 + $0x10] sm:$0xf]
  %v1917 = vld [vmem:[%s1911 + $0x14] sm:$0xf]
  %v1918 = vld [vmem:[%s1911 + $0x18] sm:$0xf]
  %v1919 = vld [vmem:[%s1911 + $0x1c] sm:$0xf]
  %v1920 = vld [vmem:[%s1911 + $0x20] sm:$0xf]
  %v1930 = vunpack.c.l.b16 %v1912
  %v1931 = vunpack.c.l.b16 %v1913
  %v1932 = vunpack.c.l.b16 %v1914
  %v1933 = vunpack.c.l.b16 %v1915
  %v1934 = vunpack.c.l.b16 %v1916
  %v1935 = vunpack.c.l.b16 %v1917
  %v1936 = vunpack.c.l.b16 %v1918
  %v1937 = vunpack.c.l.b16 %v1919
  %v1938 = vunpack.c.l.b16 %v1920
  %v1939 = vpack.c.b16 %v1931, %v1930
  %v1940 = vpack.c.b16 %v1933, %v1932
  %v1941 = vpack.c.b16 %v1935, %v1934
  %v1942 = vpack.c.b16 %v1937, %v1936
  %v1943 = vpack.c.b16 %v1938, %v1938
  %vm1944 = vcmask 588800
  %v1946 = vsel %vm1944, %v1939, 0
  %v1949 = vsel %vm1944, %v1940, 0
  %v1952 = vsel %vm1944, %v1941, 0
  %v1955 = vsel %vm1944, %v1942, 0
  %v1958 = vsel %vm1944, %v1943, 0
  %vm1960 = vcmask 1043456
  %v1962 = vsel %vm1960, %v1901, 0
  %1964 = vmatprep.subr.bf16.mxu0 0
  %1965 = vmatpush1.bf16.msra.mxu0 %v1897
  %1966 = vmatprep.subr.bf16.mxu0 0
  %1967 = vmatpush1.bf16.msra.mxu0 %v1898
  %1968 = vmatprep.subr.bf16.mxu0 0
  %1969 = vmatpush1.bf16.msra.mxu0 %v1899
  %1970 = vmatprep.subr.bf16.mxu0 0
  %1971 = vmatpush1.bf16.msra.mxu0 %v1900
  %1972 = vmatprep.subr.bf16.mxu0 0
  %1973 = vmatpush1.bf16.msra.mxu0 %v1962
  %1974 = vmatprep.subr.bf16.mxu0 0
  %1975 = vmatpush1.bf16.msra.mxu0 0
  %1976 = vmatprep.subr.bf16.mxu0 0
  %1977 = vmatpush1.bf16.msra.mxu0 0
  %1978 = vmatprep.subr.bf16.mxu0 0
  %1979 = vmatpush1.bf16.msra.mxu0 0
  %1980 = vmatprep.subr.bf16.mxu0 0
  %1981 = vmatpush1.bf16.msra.mxu0 0
  %1982 = vmatprep.subr.bf16.mxu0 0
  %1983 = vmatpush1.bf16.msra.mxu0 0
  %1984 = vmatprep.subr.bf16.mxu0 0
  %1985 = vmatpush1.bf16.msra.mxu0 0
  %1986 = vmatprep.subr.bf16.mxu0 0
  %1987 = vmatpush1.bf16.msra.mxu0 0
  %1988 = vmatprep.subr.bf16.mxu0 0
  %1989 = vmatpush1.bf16.msra.mxu0 0
  %1990 = vmatprep.subr.bf16.mxu0 0
  %1991 = vmatpush1.bf16.msra.mxu0 0
  %1992 = vmatprep.subr.bf16.mxu0 0
  %1993 = vmatpush1.bf16.msra.mxu0 0
  %1994 = vmatprep.subr.bf16.mxu0 0
  %1995 = vmatpush1.bf16.msra.mxu0 0
  %1996 = vmatprep.mubr.bf16.mxu0 0
  %1997 = vmatmul.mubr.bf16.gmra.mrb[0].mxu0 %v1946
  %v1998 = vpop.f32.mrb[0].mxu0
  %v1999 = vadd.f32 0.0, %v1998
  %v2000 = vpop.f32.mrb[0].mxu0
  %v2001 = vpop.f32.mrb[0].mxu0
  %v2002 = vadd.f32 0.0, %v2001
  %v2003 = vpop.f32.mrb[0].mxu0
  %2004 = vmatprep.mubr.bf16.mxu0 0
  %2005 = vmatmul.mubr.bf16.gmra.mrb[0].mxu0 %v1949
  %v2006 = vpop.f32.mrb[0].mxu0
  %v2007 = vadd.f32 0.0, %v2006
  %v2008 = vpop.f32.mrb[0].mxu0
  %v2009 = vpop.f32.mrb[0].mxu0
  %v2010 = vadd.f32 0.0, %v2009
  %v2011 = vpop.f32.mrb[0].mxu0
  %2012 = vmatprep.mubr.bf16.mxu0 0
  %2013 = vmatmul.mubr.bf16.gmra.mrb[0].mxu0 %v1952
  %v2014 = vpop.f32.mrb[0].mxu0
  %v2015 = vadd.f32 0.0, %v2014
  %v2016 = vpop.f32.mrb[0].mxu0
  %v2017 = vpop.f32.mrb[0].mxu0
  %v2018 = vadd.f32 0.0, %v2017
  %v2019 = vpop.f32.mrb[0].mxu0
  %2020 = vmatprep.mubr.bf16.mxu0 0
  %2021 = vmatmul.mubr.bf16.gmra.mrb[0].mxu0 %v1955
  %v2022 = vpop.f32.mrb[0].mxu0
  %v2023 = vadd.f32 0.0, %v2022
  %v2024 = vpop.f32.mrb[0].mxu0
  %v2025 = vpop.f32.mrb[0].mxu0
  %v2026 = vadd.f32 0.0, %v2025
  %v2027 = vpop.f32.mrb[0].mxu0
  %2028 = vmatprep.mubr.bf16.mxu0 0
  %2029 = vmatmul.mubr.bf16.gmra.mrb[0].mxu0 %v1958
  %v2030 = vpop.f32.mrb[0].mxu0
  %v2031 = vadd.f32 0.0, %v2030
  %v2032 = vpop.f32.mrb[0].mxu0
  %v2033 = vpop.f32.mrb[0].mxu0
  %v2034 = vpop.f32.mrb[0].mxu0
  %2035 = vdwg.mxu0
  %v2045 = vunpack.c.l.b16 %v1902
  %v2046 = vunpack.c.l.b16 %v1903
  %v2047 = vunpack.c.l.b16 %v1904
  %v2048 = vunpack.c.l.b16 %v1905
  %v2049 = vunpack.c.l.b16 %v1906
  %v2050 = vunpack.c.l.b16 %v1907
  %v2051 = vunpack.c.l.b16 %v1908
  %v2052 = vunpack.c.l.b16 %v1909
  %v2053 = vunpack.c.l.b16 %v1910
  %v2054 = vpack.c.b16 %v2046, %v2045
  %v2055 = vpack.c.b16 %v2048, %v2047
  %v2056 = vpack.c.b16 %v2050, %v2049
  %v2057 = vpack.c.b16 %v2052, %v2051
  %v2058 = vpack.c.b16 %v2053, %v2053
  %v2060 = vsel %vm1944, %v2054, 0
  %v2063 = vsel %vm1944, %v2055, 0
  %v2066 = vsel %vm1944, %v2056, 0
  %v2069 = vsel %vm1944, %v2057, 0
  %v2072 = vsel %vm1944, %v2058, 0
  %v2075 = vsel %vm1960, %v1887, 0
  %2077 = vmatprep.subr.bf16.mxu0 0
  %2078 = vmatpush1.bf16.msra.mxu0 %v1883
  %2079 = vmatprep.subr.bf16.mxu0 0
  %2080 = vmatpush1.bf16.msra.mxu0 %v1884
  %2081 = vmatprep.subr.bf16.mxu0 0
  %2082 = vmatpush1.bf16.msra.mxu0 %v1885
  %2083 = vmatprep.subr.bf16.mxu0 0
  %2084 = vmatpush1.bf16.msra.mxu0 %v1886
  %2085 = vmatprep.subr.bf16.mxu0 0
  %2086 = vmatpush1.bf16.msra.mxu0 %v2075
  %2087 = vmatprep.subr.bf16.mxu0 0
  %2088 = vmatpush1.bf16.msra.mxu0 0
  %2089 = vmatprep.subr.bf16.mxu0 0
  %2090 = vmatpush1.bf16.msra.mxu0 0
  %2091 = vmatprep.subr.bf16.mxu0 0
  %2092 = vmatpush1.bf16.msra.mxu0 0
  %2093 = vmatprep.subr.bf16.mxu0 0
  %2094 = vmatpush1.bf16.msra.mxu0 0
  %2095 = vmatprep.subr.bf16.mxu0 0
  %2096 = vmatpush1.bf16.msra.mxu0 0
  %2097 = vmatprep.subr.bf16.mxu0 0
  %2098 = vmatpush1.bf16.msra.mxu0 0
  %2099 = vmatprep.subr.bf16.mxu0 0
  %2100 = vmatpush1.bf16.msra.mxu0 0
  %2101 = vmatprep.subr.bf16.mxu0 0
  %2102 = vmatpush1.bf16.msra.mxu0 0
  %2103 = vmatprep.subr.bf16.mxu0 0
  %2104 = vmatpush1.bf16.msra.mxu0 0
  %2105 = vmatprep.subr.bf16.mxu0 0
  %2106 = vmatpush1.bf16.msra.mxu0 0
  %2107 = vmatprep.subr.bf16.mxu0 0
  %2108 = vmatpush1.bf16.msra.mxu0 0
  %2109 = vmatprep.mubr.bf16.mxu0 0
  %2110 = vmatmul.mubr.bf16.gmra.mrb[0].mxu0 %v2060
  %v2111 = vpop.f32.mrb[0].mxu0
  %v2112 = vadd.f32 %v1999, %v2111
  %v2113 = vpop.f32.mrb[0].mxu0
  %v2114 = vpop.f32.mrb[0].mxu0
  %v2115 = vadd.f32 %v2002, %v2114
  %v2116 = vpop.f32.mrb[0].mxu0
  %2117 = vmatprep.mubr.bf16.mxu0 0
  %2118 = vmatmul.mubr.bf16.gmra.mrb[0].mxu0 %v2063
  %v2119 = vpop.f32.mrb[0].mxu0
  %v2120 = vadd.f32 %v2007, %v2119
  %v2121 = vpop.f32.mrb[0].mxu0
  %v2122 = vpop.f32.mrb[0].mxu0
  %v2123 = vadd.f32 %v2010, %v2122
  %v2124 = vpop.f32.mrb[0].mxu0
  %2125 = vmatprep.mubr.bf16.mxu0 0
  %2126 = vmatmul.mubr.bf16.gmra.mrb[0].mxu0 %v2066
  %v2127 = vpop.f32.mrb[0].mxu0
  %v2128 = vadd.f32 %v2015, %v2127
  %v2129 = vpop.f32.mrb[0].mxu0
  %v2130 = vpop.f32.mrb[0].mxu0
  %v2131 = vadd.f32 %v2018, %v2130
  %v2132 = vpop.f32.mrb[0].mxu0
  %2133 = vmatprep.mubr.bf16.mxu0 0
  %2134 = vmatmul.mubr.bf16.gmra.mrb[0].mxu0 %v2069
  %v2135 = vpop.f32.mrb[0].mxu0
  %v2136 = vadd.f32 %v2023, %v2135
  %v2137 = vpop.f32.mrb[0].mxu0
  %v2138 = vpop.f32.mrb[0].mxu0
  %v2139 = vadd.f32 %v2026, %v2138
  %v2140 = vpop.f32.mrb[0].mxu0
  %2141 = vmatprep.mubr.bf16.mxu0 0
  %2142 = vmatmul.mubr.bf16.gmra.mrb[0].mxu0 %v2072
  %v2143 = vpop.f32.mrb[0].mxu0
  %v2144 = vadd.f32 %v2031, %v2143
  %v2145 = vpop.f32.mrb[0].mxu0
  %v2146 = vpop.f32.mrb[0].mxu0
  %v2147 = vpop.f32.mrb[0].mxu0
  %2148 = vdwg.mxu0
  %s2149 = scalar_lea.vmem %s2, 72
  %v2150 = vld [vmem:[%s2149] sm:$0xf]
  %v2151 = vld [vmem:[%s2149 + $0x4] sm:$0xf]
  %v2152 = vld [vmem:[%s2149 + $0x8] sm:$0xf]
  %v2153 = vld [vmem:[%s2149 + $0xc] sm:$0xf]
  %v2154 = vld [vmem:[%s2149 + $0x10] sm:$0xf]
  %v2155 = vld [vmem:[%s2149 + $0x14] sm:$0xf]
  %v2156 = vld [vmem:[%s2149 + $0x18] sm:$0xf]
  %v2157 = vld [vmem:[%s2149 + $0x1c] sm:$0xf]
  %v2158 = vld [vmem:[%s2149 + $0x20] sm:$0xf]
  %s2159 = scalar_lea.vmem %s2, 108
  %v2160 = vld [vmem:[%s2159] sm:$0xf]
  %v2161 = vld [vmem:[%s2159 + $0x4] sm:$0xf]
  %v2162 = vld [vmem:[%s2159 + $0x8] sm:$0xf]
  %v2163 = vld [vmem:[%s2159 + $0xc] sm:$0xf]
  %v2164 = vld [vmem:[%s2159 + $0x10] sm:$0xf]
  %v2165 = vld [vmem:[%s2159 + $0x14] sm:$0xf]
  %v2166 = vld [vmem:[%s2159 + $0x18] sm:$0xf]
  %v2167 = vld [vmem:[%s2159 + $0x1c] sm:$0xf]
  %v2168 = vld [vmem:[%s2159 + $0x20] sm:$0xf]
  %v2178 = vunpack.c.l.b16 %v2160
  %v2179 = vunpack.c.l.b16 %v2161
  %v2180 = vunpack.c.l.b16 %v2162
  %v2181 = vunpack.c.l.b16 %v2163
  %v2182 = vunpack.c.l.b16 %v2164
  %v2183 = vunpack.c.l.b16 %v2165
  %v2184 = vunpack.c.l.b16 %v2166
  %v2185 = vunpack.c.l.b16 %v2167
  %v2186 = vunpack.c.l.b16 %v2168
  %v2187 = vpack.c.b16 %v2179, %v2178
  %v2188 = vpack.c.b16 %v2181, %v2180
  %v2189 = vpack.c.b16 %v2183, %v2182
  %v2190 = vpack.c.b16 %v2185, %v2184
  %v2191 = vpack.c.b16 %v2186, %v2186
  %v2193 = vsel %vm1944, %v2187, 0
  %v2196 = vsel %vm1944, %v2188, 0
  %v2199 = vsel %vm1944, %v2189, 0
  %v2202 = vsel %vm1944, %v2190, 0
  %v2205 = vsel %vm1944, %v2191, 0
  %2207 = vmatprep.subr.bf16.mxu0 0
  %2208 = vmatpush1.bf16.msra.mxu0 %v1897
  %2209 = vmatprep.subr.bf16.mxu0 0
  %2210 = vmatpush1.bf16.msra.mxu0 %v1898
  %2211 = vmatprep.subr.bf16.mxu0 0
  %2212 = vmatpush1.bf16.msra.mxu0 %v1899
  %2213 = vmatprep.subr.bf16.mxu0 0
  %2214 = vmatpush1.bf16.msra.mxu0 %v1900
  %2215 = vmatprep.subr.bf16.mxu0 0
  %2216 = vmatpush1.bf16.msra.mxu0 %v1962
  %2217 = vmatprep.subr.bf16.mxu0 0
  %2218 = vmatpush1.bf16.msra.mxu0 0
  %2219 = vmatprep.subr.bf16.mxu0 0
  %2220 = vmatpush1.bf16.msra.mxu0 0
  %2221 = vmatprep.subr.bf16.mxu0 0
  %2222 = vmatpush1.bf16.msra.mxu0 0
  %2223 = vmatprep.subr.bf16.mxu0 0
  %2224 = vmatpush1.bf16.msra.mxu0 0
  %2225 = vmatprep.subr.bf16.mxu0 0
  %2226 = vmatpush1.bf16.msra.mxu0 0
  %2227 = vmatprep.subr.bf16.mxu0 0
  %2228 = vmatpush1.bf16.msra.mxu0 0
  %2229 = vmatprep.subr.bf16.mxu0 0
  %2230 = vmatpush1.bf16.msra.mxu0 0
  %2231 = vmatprep.subr.bf16.mxu0 0
  %2232 = vmatpush1.bf16.msra.mxu0 0
  %2233 = vmatprep.subr.bf16.mxu0 0
  %2234 = vmatpush1.bf16.msra.mxu0 0
  %2235 = vmatprep.subr.bf16.mxu0 0
  %2236 = vmatpush1.bf16.msra.mxu0 0
  %2237 = vmatprep.subr.bf16.mxu0 0
  %2238 = vmatpush1.bf16.msra.mxu0 0
  %2239 = vmatprep.mubr.bf16.mxu0 0
  %2240 = vmatmul.mubr.bf16.gmra.mrb[0].mxu0 %v2193
  %v2241 = vpop.f32.mrb[0].mxu0
  %v2242 = vadd.f32 0.0, %v2241
  %v2243 = vpop.f32.mrb[0].mxu0
  %v2244 = vpop.f32.mrb[0].mxu0
  %v2245 = vadd.f32 0.0, %v2244
  %v2246 = vpop.f32.mrb[0].mxu0
  %2247 = vmatprep.mubr.bf16.mxu0 0
  %2248 = vmatmul.mubr.bf16.gmra.mrb[0].mxu0 %v2196
  %v2249 = vpop.f32.mrb[0].mxu0
  %v2250 = vadd.f32 0.0, %v2249
  %v2251 = vpop.f32.mrb[0].mxu0
  %v2252 = vpop.f32.mrb[0].mxu0
  %v2253 = vadd.f32 0.0, %v2252
  %v2254 = vpop.f32.mrb[0].mxu0
  %2255 = vmatprep.mubr.bf16.mxu0 0
  %2256 = vmatmul.mubr.bf16.gmra.mrb[0].mxu0 %v2199
  %v2257 = vpop.f32.mrb[0].mxu0
  %v2258 = vadd.f32 0.0, %v2257
  %v2259 = vpop.f32.mrb[0].mxu0
  %v2260 = vpop.f32.mrb[0].mxu0
  %v2261 = vadd.f32 0.0, %v2260
  %v2262 = vpop.f32.mrb[0].mxu0
  %2263 = vmatprep.mubr.bf16.mxu0 0
  %2264 = vmatmul.mubr.bf16.gmra.mrb[0].mxu0 %v2202
  %v2265 = vpop.f32.mrb[0].mxu0
  %v2266 = vadd.f32 0.0, %v2265
  %v2267 = vpop.f32.mrb[0].mxu0
  %v2268 = vpop.f32.mrb[0].mxu0
  %v2269 = vadd.f32 0.0, %v2268
  %v2270 = vpop.f32.mrb[0].mxu0
  %2271 = vmatprep.mubr.bf16.mxu0 0
  %2272 = vmatmul.mubr.bf16.gmra.mrb[0].mxu0 %v2205
  %v2273 = vpop.f32.mrb[0].mxu0
  %v2274 = vadd.f32 0.0, %v2273
  %v2275 = vpop.f32.mrb[0].mxu0
  %v2276 = vpop.f32.mrb[0].mxu0
  %v2277 = vpop.f32.mrb[0].mxu0
  %2278 = vdwg.mxu0
  %v2288 = vunpack.c.l.b16 %v2150
  %v2289 = vunpack.c.l.b16 %v2151
  %v2290 = vunpack.c.l.b16 %v2152
  %v2291 = vunpack.c.l.b16 %v2153
  %v2292 = vunpack.c.l.b16 %v2154
  %v2293 = vunpack.c.l.b16 %v2155
  %v2294 = vunpack.c.l.b16 %v2156
  %v2295 = vunpack.c.l.b16 %v2157
  %v2296 = vunpack.c.l.b16 %v2158
  %v2297 = vpack.c.b16 %v2289, %v2288
  %v2298 = vpack.c.b16 %v2291, %v2290
  %v2299 = vpack.c.b16 %v2293, %v2292
  %v2300 = vpack.c.b16 %v2295, %v2294
  %v2301 = vpack.c.b16 %v2296, %v2296
  %v2303 = vsel %vm1944, %v2297, 0
  %v2306 = vsel %vm1944, %v2298, 0
  %v2309 = vsel %vm1944, %v2299, 0
  %v2312 = vsel %vm1944, %v2300, 0
  %v2315 = vsel %vm1944, %v2301, 0
  %2317 = vmatprep.subr.bf16.mxu0 0
  %2318 = vmatpush1.bf16.msra.mxu0 %v1883
  %2319 = vmatprep.subr.bf16.mxu0 0
  %2320 = vmatpush1.bf16.msra.mxu0 %v1884
  %2321 = vmatprep.subr.bf16.mxu0 0
  %2322 = vmatpush1.bf16.msra.mxu0 %v1885
  %2323 = vmatprep.subr.bf16.mxu0 0
  %2324 = vmatpush1.bf16.msra.mxu0 %v1886
  %2325 = vmatprep.subr.bf16.mxu0 0
  %2326 = vmatpush1.bf16.msra.mxu0 %v2075
  %2327 = vmatprep.subr.bf16.mxu0 0
  %2328 = vmatpush1.bf16.msra.mxu0 0
  %2329 = vmatprep.subr.bf16.mxu0 0
  %2330 = vmatpush1.bf16.msra.mxu0 0
  %2331 = vmatprep.subr.bf16.mxu0 0
  %2332 = vmatpush1.bf16.msra.mxu0 0
  %2333 = vmatprep.subr.bf16.mxu0 0
  %2334 = vmatpush1.bf16.msra.mxu0 0
  %2335 = vmatprep.subr.bf16.mxu0 0
  %2336 = vmatpush1.bf16.msra.mxu0 0
  %2337 = vmatprep.subr.bf16.mxu0 0
  %2338 = vmatpush1.bf16.msra.mxu0 0
  %2339 = vmatprep.subr.bf16.mxu0 0
  %2340 = vmatpush1.bf16.msra.mxu0 0
  %2341 = vmatprep.subr.bf16.mxu0 0
  %2342 = vmatpush1.bf16.msra.mxu0 0
  %2343 = vmatprep.subr.bf16.mxu0 0
  %2344 = vmatpush1.bf16.msra.mxu0 0
  %2345 = vmatprep.subr.bf16.mxu0 0
  %2346 = vmatpush1.bf16.msra.mxu0 0
  %2347 = vmatprep.subr.bf16.mxu0 0
  %2348 = vmatpush1.bf16.msra.mxu0 0
  %2349 = vmatprep.mubr.bf16.mxu0 0
  %2350 = vmatmul.mubr.bf16.gmra.mrb[0].mxu0 %v2303
  %v2351 = vpop.f32.mrb[0].mxu0
  %v2352 = vadd.f32 %v2242, %v2351
  %v2353 = vpop.f32.mrb[0].mxu0
  %v2354 = vpop.f32.mrb[0].mxu0
  %v2355 = vadd.f32 %v2245, %v2354
  %v2356 = vpop.f32.mrb[0].mxu0
  %2357 = vmatprep.mubr.bf16.mxu0 0
  %2358 = vmatmul.mubr.bf16.gmra.mrb[0].mxu0 %v2306
  %v2359 = vpop.f32.mrb[0].mxu0
  %v2360 = vadd.f32 %v2250, %v2359
  %v2361 = vpop.f32.mrb[0].mxu0
  %v2362 = vpop.f32.mrb[0].mxu0
  %v2363 = vadd.f32 %v2253, %v2362
  %v2364 = vpop.f32.mrb[0].mxu0
  %2365 = vmatprep.mubr.bf16.mxu0 0
  %2366 = vmatmul.mubr.bf16.gmra.mrb[0].mxu0 %v2309
  %v2367 = vpop.f32.mrb[0].mxu0
  %v2368 = vadd.f32 %v2258, %v2367
  %v2369 = vpop.f32.mrb[0].mxu0
  %v2370 = vpop.f32.mrb[0].mxu0
  %v2371 = vadd.f32 %v2261, %v2370
  %v2372 = vpop.f32.mrb[0].mxu0
  %2373 = vmatprep.mubr.bf16.mxu0 0
  %2374 = vmatmul.mubr.bf16.gmra.mrb[0].mxu0 %v2312
  %v2375 = vpop.f32.mrb[0].mxu0
  %v2376 = vadd.f32 %v2266, %v2375
  %v2377 = vpop.f32.mrb[0].mxu0
  %v2378 = vpop.f32.mrb[0].mxu0
  %v2379 = vadd.f32 %v2269, %v2378
  %v2380 = vpop.f32.mrb[0].mxu0
  %2381 = vmatprep.mubr.bf16.mxu0 0
  %2382 = vmatmul.mubr.bf16.gmra.mrb[0].mxu0 %v2315
  %v2383 = vpop.f32.mrb[0].mxu0
  %v2384 = vadd.f32 %v2274, %v2383
  %v2385 = vpop.f32.mrb[0].mxu0
  %v2386 = vpop.f32.mrb[0].mxu0
  %v2387 = vpop.f32.mrb[0].mxu0
  %2388 = vdwg.mxu0
  %v2389 = vrsqrt.pop %v2112
  %v2390 = vmul.f32 %v2112, %v2389
  %vm2391 = vcmp.eq.f32.partialorder %v2112, inf
  %v2392 = vsel %vm2391, %v2112, %v2390
  %vm2393 = vcmp.eq.f32.partialorder %v2112, 0.0
  %v2394 = vand.u32 %v2112, 2147483648
  %v2395 = vsel %vm2393, %v2394, %v2392
  %v2396 = vrsqrt.pop %v2115
  %v2397 = vmul.f32 %v2115, %v2396
  %vm2398 = vcmp.eq.f32.partialorder %v2115, inf
  %v2399 = vsel %vm2398, %v2115, %v2397
  %vm2400 = vcmp.eq.f32.partialorder %v2115, 0.0
  %v2401 = vand.u32 %v2115, 2147483648
  %v2402 = vsel %vm2400, %v2401, %v2399
  %v2403 = vrsqrt.pop %v2120
  %v2404 = vmul.f32 %v2120, %v2403
  %vm2405 = vcmp.eq.f32.partialorder %v2120, inf
  %v2406 = vsel %vm2405, %v2120, %v2404
  %vm2407 = vcmp.eq.f32.partialorder %v2120, 0.0
  %v2408 = vand.u32 %v2120, 2147483648
  %v2409 = vsel %vm2407, %v2408, %v2406
  %v2410 = vrsqrt.pop %v2123
  %v2411 = vmul.f32 %v2123, %v2410
  %vm2412 = vcmp.eq.f32.partialorder %v2123, inf
  %v2413 = vsel %vm2412, %v2123, %v2411
  %vm2414 = vcmp.eq.f32.partialorder %v2123, 0.0
  %v2415 = vand.u32 %v2123, 2147483648
  %v2416 = vsel %vm2414, %v2415, %v2413
  %v2417 = vrsqrt.pop %v2128
  %v2418 = vmul.f32 %v2128, %v2417
  %vm2419 = vcmp.eq.f32.partialorder %v2128, inf
  %v2420 = vsel %vm2419, %v2128, %v2418
  %vm2421 = vcmp.eq.f32.partialorder %v2128, 0.0
  %v2422 = vand.u32 %v2128, 2147483648
  %v2423 = vsel %vm2421, %v2422, %v2420
  %v2424 = vrsqrt.pop %v2131
  %v2425 = vmul.f32 %v2131, %v2424
  %vm2426 = vcmp.eq.f32.partialorder %v2131, inf
  %v2427 = vsel %vm2426, %v2131, %v2425
  %vm2428 = vcmp.eq.f32.partialorder %v2131, 0.0
  %v2429 = vand.u32 %v2131, 2147483648
  %v2430 = vsel %vm2428, %v2429, %v2427
  %v2431 = vrsqrt.pop %v2136
  %v2432 = vmul.f32 %v2136, %v2431
  %vm2433 = vcmp.eq.f32.partialorder %v2136, inf
  %v2434 = vsel %vm2433, %v2136, %v2432
  %vm2435 = vcmp.eq.f32.partialorder %v2136, 0.0
  %v2436 = vand.u32 %v2136, 2147483648
  %v2437 = vsel %vm2435, %v2436, %v2434
  %v2438 = vrsqrt.pop %v2139
  %v2439 = vmul.f32 %v2139, %v2438
  %vm2440 = vcmp.eq.f32.partialorder %v2139, inf
  %v2441 = vsel %vm2440, %v2139, %v2439
  %vm2442 = vcmp.eq.f32.partialorder %v2139, 0.0
  %v2443 = vand.u32 %v2139, 2147483648
  %v2444 = vsel %vm2442, %v2443, %v2441
  %v2445 = vrsqrt.pop %v2144
  %v2446 = vmul.f32 %v2144, %v2445
  %vm2447 = vcmp.eq.f32.partialorder %v2144, inf
  %v2448 = vsel %vm2447, %v2144, %v2446
  %vm2449 = vcmp.eq.f32.partialorder %v2144, 0.0
  %v2450 = vand.u32 %v2144, 2147483648
  %v2451 = vsel %vm2449, %v2450, %v2448
  %v2452 = vadd.f32 %v2112, 1.0
  %v2453 = vadd.f32 %v2115, 1.0
  %v2454 = vadd.f32 %v2120, 1.0
  %v2455 = vadd.f32 %v2123, 1.0
  %v2456 = vadd.f32 %v2128, 1.0
  %v2457 = vadd.f32 %v2131, 1.0
  %v2458 = vadd.f32 %v2136, 1.0
  %v2459 = vadd.f32 %v2139, 1.0
  %v2460 = vadd.f32 %v2144, 1.0
  %v2461 = vrcp.pop %v2452
  %v2462 = vrcp.pop %v2453
  %v2463 = vrcp.pop %v2454
  %v2464 = vrcp.pop %v2455
  %v2465 = vrcp.pop %v2456
  %v2466 = vrcp.pop %v2457
  %v2467 = vrcp.pop %v2458
  %v2468 = vrcp.pop %v2459
  %v2469 = vrcp.pop %v2460
  %v2470 = vmul.f32 %v2395, %v2461
  %v2471 = vmul.f32 %v2402, %v2462
  %v2472 = vmul.f32 %v2409, %v2463
  %v2473 = vmul.f32 %v2416, %v2464
  %v2474 = vmul.f32 %v2423, %v2465
  %v2475 = vmul.f32 %v2430, %v2466
  %v2476 = vmul.f32 %v2437, %v2467
  %v2477 = vmul.f32 %v2444, %v2468
  %v2478 = vmul.f32 %v2451, %v2469
  %v2479 = vrsqrt.pop %v2352
  %v2480 = vmul.f32 %v2352, %v2479
  %vm2481 = vcmp.eq.f32.partialorder %v2352, inf
  %v2482 = vsel %vm2481, %v2352, %v2480
  %vm2483 = vcmp.eq.f32.partialorder %v2352, 0.0
  %v2484 = vand.u32 %v2352, 2147483648
  %v2485 = vsel %vm2483, %v2484, %v2482
  %v2486 = vrsqrt.pop %v2355
  %v2487 = vmul.f32 %v2355, %v2486
  %vm2488 = vcmp.eq.f32.partialorder %v2355, inf
  %v2489 = vsel %vm2488, %v2355, %v2487
  %vm2490 = vcmp.eq.f32.partialorder %v2355, 0.0
  %v2491 = vand.u32 %v2355, 2147483648
  %v2492 = vsel %vm2490, %v2491, %v2489
  %v2493 = vrsqrt.pop %v2360
  %v2494 = vmul.f32 %v2360, %v2493
  %vm2495 = vcmp.eq.f32.partialorder %v2360, inf
  %v2496 = vsel %vm2495, %v2360, %v2494
  %vm2497 = vcmp.eq.f32.partialorder %v2360, 0.0
  %v2498 = vand.u32 %v2360, 2147483648
  %v2499 = vsel %vm2497, %v2498, %v2496
  %v2500 = vrsqrt.pop %v2363
  %v2501 = vmul.f32 %v2363, %v2500
  %vm2502 = vcmp.eq.f32.partialorder %v2363, inf
  %v2503 = vsel %vm2502, %v2363, %v2501
  %vm2504 = vcmp.eq.f32.partialorder %v2363, 0.0
  %v2505 = vand.u32 %v2363, 2147483648
  %v2506 = vsel %vm2504, %v2505, %v2503
  %v2507 = vrsqrt.pop %v2368
  %v2508 = vmul.f32 %v2368, %v2507
  %vm2509 = vcmp.eq.f32.partialorder %v2368, inf
  %v2510 = vsel %vm2509, %v2368, %v2508
  %vm2511 = vcmp.eq.f32.partialorder %v2368, 0.0
  %v2512 = vand.u32 %v2368, 2147483648
  %v2513 = vsel %vm2511, %v2512, %v2510
  %v2514 = vrsqrt.pop %v2371
  %v2515 = vmul.f32 %v2371, %v2514
  %vm2516 = vcmp.eq.f32.partialorder %v2371, inf
  %v2517 = vsel %vm2516, %v2371, %v2515
  %vm2518 = vcmp.eq.f32.partialorder %v2371, 0.0
  %v2519 = vand.u32 %v2371, 2147483648
  %v2520 = vsel %vm2518, %v2519, %v2517
  %v2521 = vrsqrt.pop %v2376
  %v2522 = vmul.f32 %v2376, %v2521
  %vm2523 = vcmp.eq.f32.partialorder %v2376, inf
  %v2524 = vsel %vm2523, %v2376, %v2522
  %vm2525 = vcmp.eq.f32.partialorder %v2376, 0.0
  %v2526 = vand.u32 %v2376, 2147483648
  %v2527 = vsel %vm2525, %v2526, %v2524
  %v2528 = vrsqrt.pop %v2379
  %v2529 = vmul.f32 %v2379, %v2528
  %vm2530 = vcmp.eq.f32.partialorder %v2379, inf
  %v2531 = vsel %vm2530, %v2379, %v2529
  %vm2532 = vcmp.eq.f32.partialorder %v2379, 0.0
  %v2533 = vand.u32 %v2379, 2147483648
  %v2534 = vsel %vm2532, %v2533, %v2531
  %v2535 = vrsqrt.pop %v2384
  %v2536 = vmul.f32 %v2384, %v2535
  %vm2537 = vcmp.eq.f32.partialorder %v2384, inf
  %v2538 = vsel %vm2537, %v2384, %v2536
  %vm2539 = vcmp.eq.f32.partialorder %v2384, 0.0
  %v2540 = vand.u32 %v2384, 2147483648
  %v2541 = vsel %vm2539, %v2540, %v2538
  %v2542 = vadd.f32 %v2352, 1.0
  %v2543 = vadd.f32 %v2355, 1.0
  %v2544 = vadd.f32 %v2360, 1.0
  %v2545 = vadd.f32 %v2363, 1.0
  %v2546 = vadd.f32 %v2368, 1.0
  %v2547 = vadd.f32 %v2371, 1.0
  %v2548 = vadd.f32 %v2376, 1.0
  %v2549 = vadd.f32 %v2379, 1.0
  %v2550 = vadd.f32 %v2384, 1.0
  %v2551 = vrcp.pop %v2542
  %v2552 = vrcp.pop %v2543
  %v2553 = vrcp.pop %v2544
  %v2554 = vrcp.pop %v2545
  %v2555 = vrcp.pop %v2546
  %v2556 = vrcp.pop %v2547
  %v2557 = vrcp.pop %v2548
  %v2558 = vrcp.pop %v2549
  %v2559 = vrcp.pop %v2550
  %v2560 = vmul.f32 %v2485, %v2551
  %v2561 = vmul.f32 %v2492, %v2552
  %v2562 = vmul.f32 %v2499, %v2553
  %v2563 = vmul.f32 %v2506, %v2554
  %v2564 = vmul.f32 %v2513, %v2555
  %v2565 = vmul.f32 %v2520, %v2556
  %v2566 = vmul.f32 %v2527, %v2557
  %v2567 = vmul.f32 %v2534, %v2558
  %v2568 = vmul.f32 %v2541, %v2559
  %v2569 = vmul.f32 %v1828, %v2470
  %v2570 = vmul.f32 %v1832, %v2471
  %v2571 = vmul.f32 %v1838, %v2472
  %v2572 = vmul.f32 %v1842, %v2473
  %v2573 = vmul.f32 %v1848, %v2474
  %v2574 = vmul.f32 %v1852, %v2475
  %v2575 = vmul.f32 %v1858, %v2476
  %v2576 = vmul.f32 %v1862, %v2477
  %v2577 = vmul.f32 %v1868, %v2478
  %2578 = vst [vmem:[%s3] sm:$0xff] %v2569
  %2579 = vst [vmem:[%s3 + $0x10] sm:$0xff] %v2570
  %2580 = vst [vmem:[%s3 + $0x20] sm:$0xff] %v2571
  %2581 = vst [vmem:[%s3 + $0x30] sm:$0xff] %v2572
  %2582 = vst [vmem:[%s3 + $0x40] sm:$0xff] %v2573
  %2583 = vst [vmem:[%s3 + $0x50] sm:$0xff] %v2574
  %2584 = vst [vmem:[%s3 + $0x60] sm:$0xff] %v2575
  %2585 = vst [vmem:[%s3 + $0x70] sm:$0xff] %v2576
  %2586 = vst [vmem:[%s3 + $0x80] sm:$0xff] %v2577
  %v2587 = vmul.f32 %v1830, %v2560
  %v2588 = vmul.f32 %v1834, %v2561
  %v2589 = vmul.f32 %v1840, %v2562
  %v2590 = vmul.f32 %v1844, %v2563
  %v2591 = vmul.f32 %v1850, %v2564
  %v2592 = vmul.f32 %v1854, %v2565
  %v2593 = vmul.f32 %v1860, %v2566
  %v2594 = vmul.f32 %v1864, %v2567
  %v2595 = vmul.f32 %v1870, %v2568
  %2596 = vst [vmem:[%s3 + $0x8] sm:$0xff] %v2587
  %2597 = vst [vmem:[%s3 + $0x18] sm:$0xff] %v2588
  %2598 = vst [vmem:[%s3 + $0x28] sm:$0xff] %v2589
  %2599 = vst [vmem:[%s3 + $0x38] sm:$0xff] %v2590
  %2600 = vst [vmem:[%s3 + $0x48] sm:$0xff] %v2591
  %2601 = vst [vmem:[%s3 + $0x58] sm:$0xff] %v2592
  %2602 = vst [vmem:[%s3 + $0x68] sm:$0xff] %v2593
  %2603 = vst [vmem:[%s3 + $0x78] sm:$0xff] %v2594
  %2604 = vst [vmem:[%s3 + $0x88] sm:$0xff] %v2595
  // Predicated region
  $region14: #{primary_caps_forward.1} parent=0 // pred_check
    _
  $region15: #{primary_caps_forward.1} parent=0 // pred_check_branch
    %2606 = sbr.rel (0) target = $region17
  $region16: #{primary_caps_forward.1} parent=0 // pred_region
    _
  $region17: #{primary_caps_forward.1} parent=0 // pred_fallthru
    _
  // Predicated region
  $region18: #{primary_caps_forward.1} parent=0 // pred_check
    _
  $region19: #{primary_caps_forward.1} parent=0 // pred_check_branch
    %2608 = sbr.rel (0) target = $region21
  $region20: #{primary_caps_forward.1} parent=0 // pred_region
    _
  $region21: #{primary_caps_forward.1} parent=0 // pred_fallthru
    _

</llo_original>
